<compile_context>
chip_gen: v6e
topology: v6e:2x2x1
jax: 0.10.0
libtpu: 0.0.40
codegen_flags: <defaults>
</compile_context>

<pallas_src>
import functools

import jax
import jax.numpy as jnp
from jax.experimental import pallas as pl
from jax.experimental.pallas import tpu as pltpu


def _flash_cross_attn_kernel(q_ref, kT_ref, v_ref, *refs, apply_ln, eps):
    """Grid = (query tiles ["parallel"], key tiles ["arbitrary"])."""
    if apply_ln:
        g_ref, b_ref, o_ref, m_sc, l_sc, acc_sc = refs
    else:
        o_ref, m_sc, l_sc, acc_sc = refs
        g_ref = b_ref = None

    kv = pl.program_id(1)

    @pl.when(kv == 0)
    def _():
        m_sc[...] = jnp.full_like(m_sc, -jnp.inf)
        l_sc[...] = jnp.zeros_like(l_sc)
        acc_sc[...] = jnp.zeros_like(acc_sc)

    # Scores on the MXU in the input dtype (bf16-native path), f32 accumulate.
    # q was pre-scaled by dim_head**-0.5 in the wrapper; kT is (D, TK) so no
    # in-kernel transpose is needed.
    s = jnp.dot(q_ref[...], kT_ref[...],
                preferred_element_type=jnp.float32)           # (TQ, TK) f32

    # Online softmax (max-subtracted, normalization deferred to the epilogue).
    m_prev = m_sc[...]
    m_new = jnp.maximum(m_prev, jnp.max(s, axis=-1, keepdims=True))
    alpha = jnp.exp(m_prev - m_new)                           # (TQ, 1)
    p = jnp.exp(s - m_new)                                    # (TQ, TK) f32

    l_sc[...] = alpha * l_sc[...] + jnp.sum(p, axis=-1, keepdims=True)
    acc_sc[...] = alpha * acc_sc[...] + jnp.dot(
        p.astype(v_ref.dtype), v_ref[...],
        preferred_element_type=jnp.float32)                   # (TQ, D) f32
    m_sc[...] = m_new

    @pl.when(kv == pl.num_programs(1) - 1)
    def _():
        # Deferred normalization: one EUP approximate reciprocal per query row.
        out = acc_sc[...] * pl.reciprocal(l_sc[...], approx=True)
        if apply_ln:  # nn.LayerNorm(dim) branch (params.dataset=='somethingotam')
            mu = jnp.mean(out, axis=-1, keepdims=True)
            var = jnp.mean((out - mu) ** 2, axis=-1, keepdims=True)
            out = (out - mu) * jax.lax.rsqrt(var + eps)
            out = (out * g_ref[...].astype(jnp.float32)
                   + b_ref[...].astype(jnp.float32))
        o_ref[...] = out.astype(o_ref.dtype)


def cross_attention(q, k, v, gamma=None, beta=None, *, dim_head,
                    apply_ln=False, tq=128, tk=128, eps=1e-5,
                    vmem_limit_bytes=None):
    """q:(N,D) k:(M,D) v:(M,D); gamma/beta:(1,D) (only used when apply_ln)."""
    N, D = q.shape
    M, _ = k.shape
    tq = min(tq, N)
    tk = min(tk, M)
    assert N % tq == 0 and M % tk == 0, "pad N/M to tile multiples"

    # Fold the softmax scale into q (single cheap XLA-side (N,D) multiply).
    scale = dim_head ** (-0.5)
    q_scaled = q * jnp.asarray(scale, dtype=q.dtype)
    # Pre-transpose k to (D, M) so the kernel never transposes per grid step.
    kT = k.T

    in_specs = [
        pl.BlockSpec((tq, D), lambda i, j: (i, 0)),   # q tile (fixed over j)
        pl.BlockSpec((D, tk), lambda i, j: (0, j)),   # kT tile
        pl.BlockSpec((tk, D), lambda i, j: (j, 0)),   # v tile
    ]
    args = [q_scaled, kT, v]
    if apply_ln:
        in_specs += [pl.BlockSpec((1, D), lambda i, j: (0, 0)),   # gamma
                     pl.BlockSpec((1, D), lambda i, j: (0, 0))]   # beta
        args += [gamma, beta]

    kernel = functools.partial(_flash_cross_attn_kernel,
                               apply_ln=apply_ln, eps=eps)

    return pl.pallas_call(
        kernel,
        out_shape=jax.ShapeDtypeStruct((N, D), q.dtype),
        grid_spec=pltpu.PrefetchScalarGridSpec(
            num_scalar_prefetch=0,
            grid=(N // tq, M // tk),
            in_specs=in_specs,
            out_specs=pl.BlockSpec((tq, D), lambda i, j: (i, 0)),
            scratch_shapes=[
                pltpu.VMEM((tq, 1), jnp.float32),   # running max m
                pltpu.VMEM((tq, 1), jnp.float32),   # running denom l
                pltpu.VMEM((tq, D), jnp.float32),   # unnormalized acc
            ],
        ),
        compiler_params=pltpu.CompilerParams(
            dimension_semantics=("parallel", "arbitrary"),
            vmem_limit_bytes=vmem_limit_bytes,
        ),
    )(*args)


def _reference(q, k, v, gamma, beta, *, dim_head, apply_ln, eps=1e-5):
    scale = dim_head ** (-0.5)
    dots = q.astype(jnp.float32) @ k.astype(jnp.float32).T * scale
    attn = jax.nn.softmax(dots, axis=-1)
    out = attn @ v.astype(jnp.float32)
    if apply_ln:
        mu = out.mean(-1, keepdims=True)
        var = ((out - mu) ** 2).mean(-1, keepdims=True)
        out = (out - mu) / jnp.sqrt(var + eps) * gamma + beta
    return out


if __name__ == "__main__":
    # Module defaults: dim = dim_head = 512, heads = 1 => to_out is Identity.
    DIM = 512
    DIM_HEAD = 512
    N, M = 256, 256           # 2 query tiles x 2 key tiles at tq = tk = 128

    key = jax.random.PRNGKey(0)
    kq, kk, kv, kg, kb = jax.random.split(key, 5)
    q = jax.random.normal(kq, (N, DIM), dtype=jnp.float32)
    k = jax.random.normal(kk, (M, DIM), dtype=jnp.float32)
    v = jax.random.normal(kv, (M, DIM), dtype=jnp.float32)
    gamma = 1.0 + 0.1 * jax.random.normal(kg, (1, DIM), dtype=jnp.float32)
    beta = 0.1 * jax.random.normal(kb, (1, DIM), dtype=jnp.float32)

    # Path 1: params.dataset != 'somethingotam'  -> ln_1 = nn.Identity()
    out = cross_attention(q, k, v, dim_head=DIM_HEAD, apply_ln=False,
                          tq=128, tk=128)
    out = jax.block_until_ready(out)
    ref = _reference(q, k, v, gamma, beta, dim_head=DIM_HEAD, apply_ln=False)
    assert out.shape == (N, DIM)
    # Tolerance relaxed slightly for pl.reciprocal(approx=True).
    assert jnp.allclose(out, ref, atol=5e-3, rtol=5e-3), "mismatch (no LN)"

    # Path 2: params.dataset == 'somethingotam'  -> ln_1 = nn.LayerNorm(dim)
    out_ln = cross_attention(q, k, v, gamma, beta, dim_head=DIM_HEAD,
                             apply_ln=True, tq=128, tk=128)
    out_ln = jax.block_until_ready(out_ln)
    ref_ln = _reference(q, k, v, gamma, beta, dim_head=DIM_HEAD, apply_ln=True)
    assert jnp.allclose(out_ln, ref_ln, atol=5e-3, rtol=5e-3), "mismatch (LN)"

    print("KERNEL_OK")
</pallas_src>

<mosaic_0001>
module attributes {stable_mosaic.version = 11 : i64} {
  func.func @_flash_cross_attn_kernel(%arg0: i32, %arg1: i32, %arg2: memref<128x512xf32, #tpu.memory_space<vmem>>, %arg3: memref<512x128xf32, #tpu.memory_space<vmem>>, %arg4: memref<128x512xf32, #tpu.memory_space<vmem>>, %arg5: memref<128x512xf32, #tpu.memory_space<vmem>>, %arg6: memref<128x1xf32, #tpu.memory_space<vmem>>, %arg7: memref<128x1xf32, #tpu.memory_space<vmem>>, %arg8: memref<128x512xf32, #tpu.memory_space<vmem>>) attributes {dimension_semantics = [#tpu.dimension_semantics<parallel>, #tpu.dimension_semantics<arbitrary>], iteration_bounds = array<i64: 2, 2>, scalar_prefetch = 0 : i64, scratch_operands = 3 : i64, tpu.core_type = #tpu.core_type<tc>, window_params = [{transform_indices = @transform_0, window_bounds = array<i64: 128, 512>}, {transform_indices = @transform_1, window_bounds = array<i64: 512, 128>}, {transform_indices = @transform_2, window_bounds = array<i64: 128, 512>}, {transform_indices = @transform_3, window_bounds = array<i64: 128, 512>}]} {
    %c0_i32 = arith.constant 0 : i32
    %0 = arith.cmpi eq, %arg1, %c0_i32 : i32
    %1 = arith.extui %0 : i1 to i32
    %c0_i32_0 = arith.constant 0 : i32
    %2 = arith.cmpi ne, %1, %c0_i32_0 : i32
    scf.if %2 {
      %cst_22 = arith.constant 0xFF800000 : f32
      %32 = vector.broadcast %cst_22 : f32 to vector<128x1xf32>
      %c0_23 = arith.constant 0 : index
      %c0_24 = arith.constant 0 : index
      %33 = vector.load %arg6[%c0_23, %c0_24] : memref<128x1xf32, #tpu.memory_space<vmem>>, vector<128x1xf32>
      tpu.vector_store %arg6[%c0_23, %c0_24], %32 {strides = array<i32>} : memref<128x1xf32, #tpu.memory_space<vmem>>, vector<128x1xf32>,
      %cst_25 = arith.constant 0.000000e+00 : f32
      %34 = vector.broadcast %cst_25 : f32 to vector<128x1xf32>
      %c0_26 = arith.constant 0 : index
      %c0_27 = arith.constant 0 : index
      %35 = vector.load %arg7[%c0_26, %c0_27] : memref<128x1xf32, #tpu.memory_space<vmem>>, vector<128x1xf32>
      tpu.vector_store %arg7[%c0_26, %c0_27], %34 {strides = array<i32>} : memref<128x1xf32, #tpu.memory_space<vmem>>, vector<128x1xf32>,
      %cst_28 = arith.constant 0.000000e+00 : f32
      %36 = vector.broadcast %cst_28 : f32 to vector<128x512xf32>
      %c0_29 = arith.constant 0 : index
      %c0_30 = arith.constant 0 : index
      %37 = vector.load %arg8[%c0_29, %c0_30] : memref<128x512xf32, #tpu.memory_space<vmem>>, vector<128x512xf32>
      tpu.vector_store %arg8[%c0_29, %c0_30], %36 {strides = array<i32>} : memref<128x512xf32, #tpu.memory_space<vmem>>, vector<128x512xf32>,
    } else {
    }
    %c0 = arith.constant 0 : index
    %c0_1 = arith.constant 0 : index
    %3 = vector.load %arg2[%c0, %c0_1] : memref<128x512xf32, #tpu.memory_space<vmem>>, vector<128x512xf32>
    %c0_2 = arith.constant 0 : index
    %c0_3 = arith.constant 0 : index
    %4 = vector.load %arg3[%c0_2, %c0_3] : memref<512x128xf32, #tpu.memory_space<vmem>>, vector<512x128xf32>
    %cst = arith.constant dense<0.000000e+00> : vector<128x128xf32>
    %5 = tpu.matmul %3, %4, %cst {dimension_numbers = #tpu.dot_dimension_numbers<[1], [0], [0], [1], [0, 0, 1, 1], [], []>} : vector<128x512xf32>, vector<512x128xf32>, vector<128x128xf32> -> vector<128x128xf32>
    %c0_4 = arith.constant 0 : index
    %c0_5 = arith.constant 0 : index
    %6 = vector.load %arg6[%c0_4, %c0_5] : memref<128x1xf32, #tpu.memory_space<vmem>>, vector<128x1xf32>
    %cst_6 = arith.constant dense<0xFF800000> : vector<128xf32>
    %7 = vector.multi_reduction <maximumf>, %5, %cst_6 [1] : vector<128x128xf32> to vector<128xf32>
    %8 = vector.shape_cast %7 : vector<128xf32> to vector<128x1xf32>
    %9 = arith.maximumf %6, %8 : vector<128x1xf32>
    %10 = arith.subf %6, %9 : vector<128x1xf32>
    %11 = math.exp %10 : vector<128x1xf32>
    %12 = vector.broadcast %9 : vector<128x1xf32> to vector<128x128xf32>
    %13 = arith.subf %5, %12 : vector<128x128xf32>
    %14 = math.exp %13 : vector<128x128xf32>
    %c0_7 = arith.constant 0 : index
    %c0_8 = arith.constant 0 : index
    %15 = vector.load %arg7[%c0_7, %c0_8] : memref<128x1xf32, #tpu.memory_space<vmem>>, vector<128x1xf32>
    %16 = arith.mulf %11, %15 : vector<128x1xf32>
    %cst_9 = arith.constant dense<0.000000e+00> : vector<128xf32>
    %17 = vector.multi_reduction <add>, %14, %cst_9 [1] : vector<128x128xf32> to vector<128xf32>
    %18 = vector.shape_cast %17 : vector<128xf32> to vector<128x1xf32>
    %19 = arith.addf %16, %18 : vector<128x1xf32>
    %c0_10 = arith.constant 0 : index
    %c0_11 = arith.constant 0 : index
    %20 = vector.load %arg7[%c0_10, %c0_11] : memref<128x1xf32, #tpu.memory_space<vmem>>, vector<128x1xf32>
    tpu.vector_store %arg7[%c0_10, %c0_11], %19 {strides = array<i32>} : memref<128x1xf32, #tpu.memory_space<vmem>>, vector<128x1xf32>,
    %c0_12 = arith.constant 0 : index
    %c0_13 = arith.constant 0 : index
    %21 = vector.load %arg8[%c0_12, %c0_13] : memref<128x512xf32, #tpu.memory_space<vmem>>, vector<128x512xf32>
    %22 = vector.broadcast %11 : vector<128x1xf32> to vector<128x512xf32>
    %23 = arith.mulf %22, %21 : vector<128x512xf32>
    %c0_14 = arith.constant 0 : index
    %c0_15 = arith.constant 0 : index
    %24 = vector.load %arg4[%c0_14, %c0_15] : memref<128x512xf32, #tpu.memory_space<vmem>>, vector<128x512xf32>
    %cst_16 = arith.constant dense<0.000000e+00> : vector<128x512xf32>
    %25 = tpu.matmul %14, %24, %cst_16 {dimension_numbers = #tpu.dot_dimension_numbers<[1], [0], [0], [1], [0, 0, 1, 1], [], []>} : vector<128x128xf32>, vector<128x512xf32>, vector<128x512xf32> -> vector<128x512xf32>
    %26 = arith.addf %23, %25 : vector<128x512xf32>
    %c0_17 = arith.constant 0 : index
    %c0_18 = arith.constant 0 : index
    %27 = vector.load %arg8[%c0_17, %c0_18] : memref<128x512xf32, #tpu.memory_space<vmem>>, vector<128x512xf32>
    tpu.vector_store %arg8[%c0_17, %c0_18], %26 {strides = array<i32>} : memref<128x512xf32, #tpu.memory_space<vmem>>, vector<128x512xf32>,
    %c0_19 = arith.constant 0 : index
    %c0_20 = arith.constant 0 : index
    %28 = vector.load %arg6[%c0_19, %c0_20] : memref<128x1xf32, #tpu.memory_space<vmem>>, vector<128x1xf32>
    tpu.vector_store %arg6[%c0_19, %c0_20], %9 {strides = array<i32>} : memref<128x1xf32, #tpu.memory_space<vmem>>, vector<128x1xf32>,
    %c1_i32 = arith.constant 1 : i32
    %29 = arith.cmpi eq, %arg1, %c1_i32 : i32
    %30 = arith.extui %29 : i1 to i32
    %c0_i32_21 = arith.constant 0 : i32
    %31 = arith.cmpi ne, %30, %c0_i32_21 : i32
    scf.if %31 {
      %c0_22 = arith.constant 0 : index
      %c0_23 = arith.constant 0 : index
      %32 = vector.load %arg8[%c0_22, %c0_23] : memref<128x512xf32, #tpu.memory_space<vmem>>, vector<128x512xf32>
      %c0_24 = arith.constant 0 : index
      %c0_25 = arith.constant 0 : index
      %33 = vector.load %arg7[%c0_24, %c0_25] : memref<128x1xf32, #tpu.memory_space<vmem>>, vector<128x1xf32>
      %34 = tpu.reciprocal %33 {approx = true} : vector<128x1xf32> -> vector<128x1xf32>
      %35 = vector.broadcast %34 : vector<128x1xf32> to vector<128x512xf32>
      %36 = arith.mulf %32, %35 : vector<128x512xf32>
      %c0_26 = arith.constant 0 : index
      %c0_27 = arith.constant 0 : index
      %37 = vector.load %arg5[%c0_26, %c0_27] : memref<128x512xf32, #tpu.memory_space<vmem>>, vector<128x512xf32>
      tpu.vector_store %arg5[%c0_26, %c0_27], %36 {strides = array<i32>} : memref<128x512xf32, #tpu.memory_space<vmem>>, vector<128x512xf32>,
    } else {
    }
    return
  }
  func.func @transform_0(%arg0: i32, %arg1: i32) -> (i32, i32) {
    %c0_i32 = arith.constant 0 : i32
    %c0_i32_0 = arith.constant 0 : i32
    return %arg0, %c0_i32 : i32, i32
  }
  func.func @transform_1(%arg0: i32, %arg1: i32) -> (i32, i32) {
    %c0_i32 = arith.constant 0 : i32
    %c0_i32_0 = arith.constant 0 : i32
    return %c0_i32, %arg1 : i32, i32
  }
  func.func @transform_2(%arg0: i32, %arg1: i32) -> (i32, i32) {
    %c0_i32 = arith.constant 0 : i32
    %c0_i32_0 = arith.constant 0 : i32
    return %arg1, %c0_i32 : i32, i32
  }
  func.func @transform_3(%arg0: i32, %arg1: i32) -> (i32, i32) {
    %c0_i32 = arith.constant 0 : i32
    %c0_i32_0 = arith.constant 0 : i32
    return %arg0, %c0_i32 : i32, i32
  }
}

</mosaic_0001>

<llo_original>
// kernel: tpu_custom_call.1
$region0: #{tpu_custom_call.1}
  #allocation0 [shape = 'u32[]', space=smem, size = 0x4, offset = 0x4, fixed_abs, tag = 'smem constant byte address 0x4 - core index']
  #allocation1 [shape = 'u32[144,128]{1,0:T(1,128)}', space=vmem, size = 0x12000, scoped, tag = 'internal scratch']
  #allocation2 [shape = 'f32[128,1]{1,0:T(8,128)}', space=vmem, size = 0x10000, scoped, tag = 'scratch operand']
  #allocation3 [shape = 'f32[128,1]{1,0:T(8,128)}', space=vmem, size = 0x10000, scoped, tag = 'scratch operand']
  #allocation4 [shape = 'f32[128,512]{1,0:T(8,128)}', space=vmem, size = 0x40000, scoped, tag = 'scratch operand']
  %s0 = inlined_call_operand.hbm [shape: f32[256,512], index: 0, kind: input, shape index: {}]
  %s1 = inlined_call_operand.hbm [shape: f32[512,256], index: 1, kind: input, shape index: {}]
  %s2 = inlined_call_operand.hbm [shape: f32[256,512], index: 2, kind: input, shape index: {}]
  %s3 = inlined_call_operand.hbm [shape: f32[256,512], index: 3, kind: output, shape index: {}]
  %s4 = sld [smem:[#allocation0]]
  $region65: #{tpu_custom_call.1} parent=0
    _
  %s6 = ssub.s32 1, %s4
  %s7 = scalar_select 0, %s6, %s4
  $region1: #{tpu_custom_call.1} parent=0
    #allocation5 [shape = 'u8[524288]{0}', space=vmem, size = 0x80000, scoped, tag = 'input window, operand 0']
    #allocation6 [shape = 's32[2]{0}', space=sflag, size = 0x8, scoped, tag = 'scoped memory for tpu_custom_call.1']
    #allocation7 [shape = 's32[2]{0}', space=sflag, size = 0x8, scoped, tag = 'scoped memory for tpu_custom_call.1']
    #allocation8 [shape = 'u8[524288]{0}', space=vmem, size = 0x80000, scoped, tag = 'input window, operand 1']
    #allocation9 [shape = 's32[2]{0}', space=sflag, size = 0x8, scoped, tag = 'scoped memory for tpu_custom_call.1']
    #allocation10 [shape = 'u8[524288]{0}', space=vmem, size = 0x80000, scoped, tag = 'input window, operand 2']
    #allocation11 [shape = 'u8[524288]{0}', space=vmem, size = 0x80000, scoped, tag = 'output window, operand 0']
    %8 = vsyncpa [#allocation6], 0
    %s9 = scalar_lea.sflag [#allocation6], 1
    %10 = vsyncpa %s9, 0
    %11 = vsyncpa [#allocation9], 0
    %s12 = scalar_lea.sflag [#allocation9], 1
    %13 = vsyncpa %s12, 0
    %14 = vsyncpa [#allocation7], 0
    %s15 = scalar_lea.sflag [#allocation7], 1
    %16 = vsyncpa %s15, 0
    loop: start=0, step=1, limit=6
    $region2: #{tpu_custom_call.1} parent=1 // loop_pre_header
      _
    $region3: #{tpu_custom_call.1} parent=1 // loop_header
      %s18 = sphi 0, %s22
      %p19 = scmp.ge.s32.totalorder %s18, 6
      %s25 = sphi 0, %s37
      %s26 = sphi 0, %s33
      %s27 = sphi 0, %s25
      %s28 = sphi 0, %s26
      %s29 = sphi 0, %s27
      %s30 = sphi 0, %s28
      %s40 = sphi 0, %s42
      %s43 = sphi 0, %s40
      %s44 = sphi 0, %s43
      %s60 = sphi 0, %s44
      %s66 = sphi 0, %s68
      %s69 = sphi 0, %s66
      %s70 = sphi 0, %s69
      %s86 = sphi 0, %s70
      %s92 = sphi 0, %s94
      %s95 = sphi 0, %s92
      %s96 = sphi 0, %s95
      %s112 = sphi 0, %s96
      %s118 = sphi 0, %s120
      %s121 = sphi 0, %s118
      %s122 = sphi 0, %s121
      %s138 = sphi 0, %s122
    $region4: #{tpu_custom_call.1} parent=1 // loop_header_branch
      %21 = sbr.rel (%p19) target = $region8
    $region5: #{tpu_custom_call.1} parent=1 // loop_body
      %s23 = ssub.s32 %s18, 1
      %s24 = ssub.s32 %s18, 2
      %s31 = sadd.s32 1, %s26
      %p32 = scmp.ge.s32.totalorder %s31, 2
      %s33 = scalar_select %p32, 0, %s31
      %s34 = sadd.s32 1, %s25
      %s35 = scalar_select %p32, %s34, %s25
      %p36 = scmp.ge.s32.totalorder %s35, 2
      %s37 = scalar_select %p36, 0, %s35
      %s38 = ssub.s32 %s25, %s37
      %p39 = scmp.eq.s32.totalorder %s38, 0
      %s41 = sadd.s32 %s40, 1
      %s42 = scalar_select %p39, %s40, %s41
      %p45 = pneg %p39
      %p46 = scmp.eq.s32.totalorder %s18, 3
      %p47 = por %p45, %p46
      %p48 = scmp.ne.s32.totalorder %s40, %s43
      %p49 = scmp.eq.s32.totalorder %s18, 0
      %p50 = por %p48, %p49
      %p51 = scmp.ne.s32.totalorder %s40, %s43
      %p52 = scmp.eq.s32.totalorder %s23, 3
      %p53 = por %p51, %p52
      %p54 = scmp.ne.s32.totalorder %s43, %s44
      %p55 = scmp.eq.s32.totalorder %s23, 0
      %p56 = por %p54, %p55
      %p57 = scmp.ne.s32.totalorder %s43, %s44
      %p58 = scmp.eq.s32.totalorder %s24, 3
      %p59 = por %p57, %p58
      %p61 = scmp.ne.s32.totalorder %s44, %s60
      %p62 = scmp.eq.s32.totalorder %s24, 0
      %p63 = por %p61, %p62
      %s64 = ssub.s32 %s26, %s33
      %p65 = scmp.eq.s32.totalorder %s64, 0
      %s67 = sadd.s32 %s66, 1
      %s68 = scalar_select %p65, %s66, %s67
      %p71 = pneg %p65
      %p72 = scmp.eq.s32.totalorder %s18, 3
      %p73 = por %p71, %p72
      %p74 = scmp.ne.s32.totalorder %s66, %s69
      %p75 = scmp.eq.s32.totalorder %s18, 0
      %p76 = por %p74, %p75
      %p77 = scmp.ne.s32.totalorder %s66, %s69
      %p78 = scmp.eq.s32.totalorder %s23, 3
      %p79 = por %p77, %p78
      %p80 = scmp.ne.s32.totalorder %s69, %s70
      %p81 = scmp.eq.s32.totalorder %s23, 0
      %p82 = por %p80, %p81
      %p83 = scmp.ne.s32.totalorder %s69, %s70
      %p84 = scmp.eq.s32.totalorder %s24, 3
      %p85 = por %p83, %p84
      %p87 = scmp.ne.s32.totalorder %s70, %s86
      %p88 = scmp.eq.s32.totalorder %s24, 0
      %p89 = por %p87, %p88
      %s90 = ssub.s32 %s26, %s33
      %p91 = scmp.eq.s32.totalorder %s90, 0
      %s93 = sadd.s32 %s92, 1
      %s94 = scalar_select %p91, %s92, %s93
      %p97 = pneg %p91
      %p98 = scmp.eq.s32.totalorder %s18, 3
      %p99 = por %p97, %p98
      %p100 = scmp.ne.s32.totalorder %s92, %s95
      %p101 = scmp.eq.s32.totalorder %s18, 0
      %p102 = por %p100, %p101
      %p103 = scmp.ne.s32.totalorder %s92, %s95
      %p104 = scmp.eq.s32.totalorder %s23, 3
      %p105 = por %p103, %p104
      %p106 = scmp.ne.s32.totalorder %s95, %s96
      %p107 = scmp.eq.s32.totalorder %s23, 0
      %p108 = por %p106, %p107
      %p109 = scmp.ne.s32.totalorder %s95, %s96
      %p110 = scmp.eq.s32.totalorder %s24, 3
      %p111 = por %p109, %p110
      %p113 = scmp.ne.s32.totalorder %s96, %s112
      %p114 = scmp.eq.s32.totalorder %s24, 0
      %p115 = por %p113, %p114
      %s116 = ssub.s32 %s25, %s37
      %p117 = scmp.eq.s32.totalorder %s116, 0
      %s119 = sadd.s32 %s118, 1
      %s120 = scalar_select %p117, %s118, %s119
      %p123 = pneg %p117
      %p124 = scmp.eq.s32.totalorder %s18, 3
      %p125 = por %p123, %p124
      %p126 = scmp.ne.s32.totalorder %s118, %s121
      %p127 = scmp.eq.s32.totalorder %s18, 0
      %p128 = por %p126, %p127
      %p129 = scmp.ne.s32.totalorder %s118, %s121
      %p130 = scmp.eq.s32.totalorder %s23, 3
      %p131 = por %p129, %p130
      %p132 = scmp.ne.s32.totalorder %s121, %s122
      %p133 = scmp.eq.s32.totalorder %s23, 0
      %p134 = por %p132, %p133
      %p135 = scmp.ne.s32.totalorder %s121, %s122
      %p136 = scmp.eq.s32.totalorder %s24, 3
      %p137 = por %p135, %p136
      %p139 = scmp.ne.s32.totalorder %s122, %s138
      %p140 = scmp.eq.s32.totalorder %s24, 0
      %p141 = por %p139, %p140
      %p142 = scmp.le.s32.totalorder 1, %s18
      %p143 = scmp.lt.s32.totalorder %s18, 5
      %p144 = pnand %p142, %p143
      %p145 = pneg %p144
      // Predicated region
      $region9: #{tpu_custom_call.1} parent=5 // pred_check
        _
      $region10: #{tpu_custom_call.1} parent=5 // pred_check_branch
        %147 = sbr.rel (%p144) target = $region12
      $region11: #{tpu_custom_call.1} parent=5 // pred_region
        %s148 = ssub.s32 %s18, 1
      $region12: #{tpu_custom_call.1} parent=5 // pred_fallthru
        _
      %p149 = scmp.lt.s32.totalorder %s18, 4
      // Predicated region
      $region13: #{tpu_custom_call.1} parent=5 // pred_check
        %p150 = pneg %p149
      $region14: #{tpu_custom_call.1} parent=5 // pred_check_branch
        %152 = sbr.rel (%p150) target = $region16
      $region15: #{tpu_custom_call.1} parent=5 // pred_region
        // Predicated region
        $region17: #{tpu_custom_call.1} parent=15 // pred_check
          %p153 = pneg %p50
        $region18: #{tpu_custom_call.1} parent=15 // pred_check_branch
          %155 = sbr.rel (%p153) target = $region20
        $region19: #{tpu_custom_call.1} parent=15 // pred_region
          %s156 = sand.u32 %s40, 1
          %s157 = scalar_lea.sflag [#allocation6], %s156
          %s158 = sand.u32 %s40, 1
          %s159 = smul.addr %s158, 512
          %s160 = scalar_lea.vmem [#allocation5], %s159
          %s161 = smul.u32 16, %s25
          %s163 = ssub.s32 8192, 8192
          %164 = vsyncadd %s157, %s163
          %s165 = smul.addr %s161, 4
          %s166 = smul.addr %s165, 128
          %s167 = scalar_lea.hbm %s0, %s166
          %s168 = sshll.u32 %s160, 4
          %s169 = int_to_ptr.vmem [resolvable:$true] %s168
          %174 = dma.hbm_to_vmem [thread:$0]  %s167, 8192, %s169, %s157, 512, 512, 32
        $region20: #{tpu_custom_call.1} parent=15 // pred_fallthru
          _
        // Predicated region
        $region21: #{tpu_custom_call.1} parent=15 // pred_check
          %p175 = pneg %p76
        $region22: #{tpu_custom_call.1} parent=15 // pred_check_branch
          %177 = sbr.rel (%p175) target = $region24
        $region23: #{tpu_custom_call.1} parent=15 // pred_region
          %s178 = sand.u32 %s18, 1
          %s179 = scalar_lea.sflag [#allocation9], %s178
          %s180 = sand.u32 %s66, 1
          %s181 = smul.addr %s180, 512
          %s182 = scalar_lea.vmem [#allocation8], %s181
          %s184 = ssub.s32 8192, 8192
          %185 = vsyncadd %s179, %s184
          %s186 = smul.addr %s26, 128
          %s187 = scalar_lea.hbm %s1, %s186
          %s188 = sshll.u32 %s182, 4
          %s189 = int_to_ptr.vmem [resolvable:$true] %s188
          %194 = dma.hbm_to_vmem [thread:$0]  %s187, 8192, %s189, %s179, 256, 128, 8
        $region24: #{tpu_custom_call.1} parent=15 // pred_fallthru
          _
        // Predicated region
        $region25: #{tpu_custom_call.1} parent=15 // pred_check
          %p195 = pneg %p102
        $region26: #{tpu_custom_call.1} parent=15 // pred_check_branch
          %197 = sbr.rel (%p195) target = $region28
        $region27: #{tpu_custom_call.1} parent=15 // pred_region
          %s198 = sand.u32 %s18, 1
          %s199 = scalar_lea.sflag [#allocation9], %s198
          %s200 = sand.u32 %s92, 1
          %s201 = smul.addr %s200, 512
          %s202 = scalar_lea.vmem [#allocation10], %s201
          %s203 = smul.u32 16, %s26
          %s205 = ssub.s32 8192, 8192
          %206 = vsyncadd %s199, %s205
          %s207 = smul.addr %s203, 4
          %s208 = smul.addr %s207, 128
          %s209 = scalar_lea.hbm %s2, %s208
          %s210 = sshll.u32 %s202, 4
          %s211 = int_to_ptr.vmem [resolvable:$true] %s210
          %216 = dma.hbm_to_vmem [thread:$0]  %s209, 8192, %s211, %s199, 512, 512, 32
        $region28: #{tpu_custom_call.1} parent=15 // pred_fallthru
          _
      $region16: #{tpu_custom_call.1} parent=5 // pred_fallthru
        _
      %p217 = scmp.le.s32.totalorder 1, %s18
      %p218 = scmp.lt.s32.totalorder %s18, 5
      %p219 = pnand %p217, %p218
      %p220 = pneg %p219
      // Predicated region
      $region29: #{tpu_custom_call.1} parent=5 // pred_check
        _
      $region30: #{tpu_custom_call.1} parent=5 // pred_check_branch
        %222 = sbr.rel (%p219) target = $region32
      $region31: #{tpu_custom_call.1} parent=5 // pred_region
        %s223 = ssub.s32 %s18, 1
        %s224 = sand.u32 %s43, 1
        %s225 = scalar_lea.sflag [#allocation6], %s224
        %s226 = sand.u32 %s43, 1
        %s227 = smul.addr %s226, 512
        %s228 = scalar_lea.vmem [#allocation5], %s227
        // Predicated region
        $region33: #{tpu_custom_call.1} parent=31 // pred_check
          %p229 = pneg %p56
        $region34: #{tpu_custom_call.1} parent=31 // pred_check_branch
          %231 = sbr.rel (%p229) target = $region36
        $region35: #{tpu_custom_call.1} parent=31 // pred_region
          %232 = dma.done %s225, 8192
        $region36: #{tpu_custom_call.1} parent=31 // pred_fallthru
          _
        %s233 = sand.u32 %s23, 1
        %s234 = scalar_lea.sflag [#allocation9], %s233
        %s235 = sand.u32 %s69, 1
        %s236 = smul.addr %s235, 512
        %s237 = scalar_lea.vmem [#allocation8], %s236
        // Predicated region
        $region37: #{tpu_custom_call.1} parent=31 // pred_check
          %p238 = pneg %p82
        $region38: #{tpu_custom_call.1} parent=31 // pred_check_branch
          %240 = sbr.rel (%p238) target = $region40
        $region39: #{tpu_custom_call.1} parent=31 // pred_region
          %241 = dma.done %s234, 8192
        $region40: #{tpu_custom_call.1} parent=31 // pred_fallthru
          _
        %s242 = sand.u32 %s23, 1
        %s243 = scalar_lea.sflag [#allocation9], %s242
        %s244 = sand.u32 %s95, 1
        %s245 = smul.addr %s244, 512
        %s246 = scalar_lea.vmem [#allocation10], %s245
        // Predicated region
        $region41: #{tpu_custom_call.1} parent=31 // pred_check
          %p247 = pneg %p108
        $region42: #{tpu_custom_call.1} parent=31 // pred_check_branch
          %249 = sbr.rel (%p247) target = $region44
        $region43: #{tpu_custom_call.1} parent=31 // pred_region
          %250 = dma.done %s243, 8192
        $region44: #{tpu_custom_call.1} parent=31 // pred_fallthru
          _
        %s251 = sand.u32 %s43, 1
        %s252 = scalar_lea.sflag [#allocation6], %s251
        %s253 = sand.u32 %s43, 1
        %s254 = smul.addr %s253, 512
        %s255 = scalar_lea.vmem [#allocation5], %s254
        %p256 = pneg %p56
        %p257 = pneg %p53
        %s258 = sand.u32 %s23, 1
        %s259 = scalar_lea.sflag [#allocation9], %s258
        %s260 = sand.u32 %s69, 1
        %s261 = smul.addr %s260, 512
        %s262 = scalar_lea.vmem [#allocation8], %s261
        %p263 = pneg %p82
        %p264 = pneg %p79
        %s265 = sand.u32 %s23, 1
        %s266 = scalar_lea.sflag [#allocation9], %s265
        %s267 = sand.u32 %s95, 1
        %s268 = smul.addr %s267, 512
        %s269 = scalar_lea.vmem [#allocation10], %s268
        %p270 = pneg %p108
        %p271 = pneg %p105
        %p272 = pneg %p134
        %p273 = pneg %p131
        %s274 = sand.u32 %s121, 1
        %s275 = scalar_lea.sflag [#allocation7], %s274
        %s276 = sand.u32 %s121, 1
        %s277 = smul.addr %s276, 512
        %s278 = scalar_lea.vmem [#allocation11], %s277
        %s279 = smul.u32 16, %s27
        %s280 = smul.u32 16, %s28
        %s281 = smul.u32 16, %s27
        %p282 = scmp.eq.s32.totalorder %s28, 0
        // Predicated region
        $region45: #{tpu_custom_call.1} parent=31 // pred_check
          %p283 = pneg %p282
        $region46: #{tpu_custom_call.1} parent=31 // pred_check_branch
          %285 = sbr.rel (%p283) target = $region48
        $region47: #{tpu_custom_call.1} parent=31 // pred_region
          %vm286 = vcmask 7168
          %287 = vst.msk [vmem:[#allocation2] sm:$0xff] %vm286, -inf
          %288 = vst.msk [vmem:[#allocation2 + $0x8] sm:$0xff] %vm286, -inf
          %289 = vst.msk [vmem:[#allocation2 + $0x10] sm:$0xff] %vm286, -inf
          %290 = vst.msk [vmem:[#allocation2 + $0x18] sm:$0xff] %vm286, -inf
          %291 = vst.msk [vmem:[#allocation2 + $0x20] sm:$0xff] %vm286, -inf
          %292 = vst.msk [vmem:[#allocation2 + $0x28] sm:$0xff] %vm286, -inf
          %293 = vst.msk [vmem:[#allocation2 + $0x30] sm:$0xff] %vm286, -inf
          %294 = vst.msk [vmem:[#allocation2 + $0x38] sm:$0xff] %vm286, -inf
          %295 = vst.msk [vmem:[#allocation2 + $0x40] sm:$0xff] %vm286, -inf
          %296 = vst.msk [vmem:[#allocation2 + $0x48] sm:$0xff] %vm286, -inf
          %297 = vst.msk [vmem:[#allocation2 + $0x50] sm:$0xff] %vm286, -inf
          %298 = vst.msk [vmem:[#allocation2 + $0x58] sm:$0xff] %vm286, -inf
          %299 = vst.msk [vmem:[#allocation2 + $0x60] sm:$0xff] %vm286, -inf
          %300 = vst.msk [vmem:[#allocation2 + $0x68] sm:$0xff] %vm286, -inf
          %301 = vst.msk [vmem:[#allocation2 + $0x70] sm:$0xff] %vm286, -inf
          %302 = vst.msk [vmem:[#allocation2 + $0x78] sm:$0xff] %vm286, -inf
          %303 = vst.msk [vmem:[#allocation3] sm:$0xff] %vm286, 0.0
          %304 = vst.msk [vmem:[#allocation3 + $0x8] sm:$0xff] %vm286, 0.0
          %305 = vst.msk [vmem:[#allocation3 + $0x10] sm:$0xff] %vm286, 0.0
          %306 = vst.msk [vmem:[#allocation3 + $0x18] sm:$0xff] %vm286, 0.0
          %307 = vst.msk [vmem:[#allocation3 + $0x20] sm:$0xff] %vm286, 0.0
          %308 = vst.msk [vmem:[#allocation3 + $0x28] sm:$0xff] %vm286, 0.0
          %309 = vst.msk [vmem:[#allocation3 + $0x30] sm:$0xff] %vm286, 0.0
          %310 = vst.msk [vmem:[#allocation3 + $0x38] sm:$0xff] %vm286, 0.0
          %311 = vst.msk [vmem:[#allocation3 + $0x40] sm:$0xff] %vm286, 0.0
          %312 = vst.msk [vmem:[#allocation3 + $0x48] sm:$0xff] %vm286, 0.0
          %313 = vst.msk [vmem:[#allocation3 + $0x50] sm:$0xff] %vm286, 0.0
          %314 = vst.msk [vmem:[#allocation3 + $0x58] sm:$0xff] %vm286, 0.0
          %315 = vst.msk [vmem:[#allocation3 + $0x60] sm:$0xff] %vm286, 0.0
          %316 = vst.msk [vmem:[#allocation3 + $0x68] sm:$0xff] %vm286, 0.0
          %317 = vst.msk [vmem:[#allocation3 + $0x70] sm:$0xff] %vm286, 0.0
          %318 = vst.msk [vmem:[#allocation3 + $0x78] sm:$0xff] %vm286, 0.0
          %319 = vst [vmem:[#allocation4] sm:$0xff] 0.0
          %320 = vst [vmem:[#allocation4 + $0x8] sm:$0xff] 0.0
          %321 = vst [vmem:[#allocation4 + $0x10] sm:$0xff] 0.0
          %322 = vst [vmem:[#allocation4 + $0x18] sm:$0xff] 0.0
          %323 = vst [vmem:[#allocation4 + $0x20] sm:$0xff] 0.0
          %324 = vst [vmem:[#allocation4 + $0x28] sm:$0xff] 0.0
          %325 = vst [vmem:[#allocation4 + $0x30] sm:$0xff] 0.0
          %326 = vst [vmem:[#allocation4 + $0x38] sm:$0xff] 0.0
          %327 = vst [vmem:[#allocation4 + $0x40] sm:$0xff] 0.0
          %328 = vst [vmem:[#allocation4 + $0x48] sm:$0xff] 0.0
          %329 = vst [vmem:[#allocation4 + $0x50] sm:$0xff] 0.0
          %330 = vst [vmem:[#allocation4 + $0x58] sm:$0xff] 0.0
          %331 = vst [vmem:[#allocation4 + $0x60] sm:$0xff] 0.0
          %332 = vst [vmem:[#allocation4 + $0x68] sm:$0xff] 0.0
          %333 = vst [vmem:[#allocation4 + $0x70] sm:$0xff] 0.0
          %334 = vst [vmem:[#allocation4 + $0x78] sm:$0xff] 0.0
          %335 = vst [vmem:[#allocation4 + $0x80] sm:$0xff] 0.0
          %336 = vst [vmem:[#allocation4 + $0x88] sm:$0xff] 0.0
          %337 = vst [vmem:[#allocation4 + $0x90] sm:$0xff] 0.0
          %338 = vst [vmem:[#allocation4 + $0x98] sm:$0xff] 0.0
          %339 = vst [vmem:[#allocation4 + $0xa0] sm:$0xff] 0.0
          %340 = vst [vmem:[#allocation4 + $0xa8] sm:$0xff] 0.0
          %341 = vst [vmem:[#allocation4 + $0xb0] sm:$0xff] 0.0
          %342 = vst [vmem:[#allocation4 + $0xb8] sm:$0xff] 0.0
          %343 = vst [vmem:[#allocation4 + $0xc0] sm:$0xff] 0.0
          %344 = vst [vmem:[#allocation4 + $0xc8] sm:$0xff] 0.0
          %345 = vst [vmem:[#allocation4 + $0xd0] sm:$0xff] 0.0
          %346 = vst [vmem:[#allocation4 + $0xd8] sm:$0xff] 0.0
          %347 = vst [vmem:[#allocation4 + $0xe0] sm:$0xff] 0.0
          %348 = vst [vmem:[#allocation4 + $0xe8] sm:$0xff] 0.0
          %349 = vst [vmem:[#allocation4 + $0xf0] sm:$0xff] 0.0
          %350 = vst [vmem:[#allocation4 + $0xf8] sm:$0xff] 0.0
          %351 = vst [vmem:[#allocation4 + $0x100] sm:$0xff] 0.0
          %352 = vst [vmem:[#allocation4 + $0x108] sm:$0xff] 0.0
          %353 = vst [vmem:[#allocation4 + $0x110] sm:$0xff] 0.0
          %354 = vst [vmem:[#allocation4 + $0x118] sm:$0xff] 0.0
          %355 = vst [vmem:[#allocation4 + $0x120] sm:$0xff] 0.0
          %356 = vst [vmem:[#allocation4 + $0x128] sm:$0xff] 0.0
          %357 = vst [vmem:[#allocation4 + $0x130] sm:$0xff] 0.0
          %358 = vst [vmem:[#allocation4 + $0x138] sm:$0xff] 0.0
          %359 = vst [vmem:[#allocation4 + $0x140] sm:$0xff] 0.0
          %360 = vst [vmem:[#allocation4 + $0x148] sm:$0xff] 0.0
          %361 = vst [vmem:[#allocation4 + $0x150] sm:$0xff] 0.0
          %362 = vst [vmem:[#allocation4 + $0x158] sm:$0xff] 0.0
          %363 = vst [vmem:[#allocation4 + $0x160] sm:$0xff] 0.0
          %364 = vst [vmem:[#allocation4 + $0x168] sm:$0xff] 0.0
          %365 = vst [vmem:[#allocation4 + $0x170] sm:$0xff] 0.0
          %366 = vst [vmem:[#allocation4 + $0x178] sm:$0xff] 0.0
          %367 = vst [vmem:[#allocation4 + $0x180] sm:$0xff] 0.0
          %368 = vst [vmem:[#allocation4 + $0x188] sm:$0xff] 0.0
          %369 = vst [vmem:[#allocation4 + $0x190] sm:$0xff] 0.0
          %370 = vst [vmem:[#allocation4 + $0x198] sm:$0xff] 0.0
          %371 = vst [vmem:[#allocation4 + $0x1a0] sm:$0xff] 0.0
          %372 = vst [vmem:[#allocation4 + $0x1a8] sm:$0xff] 0.0
          %373 = vst [vmem:[#allocation4 + $0x1b0] sm:$0xff] 0.0
          %374 = vst [vmem:[#allocation4 + $0x1b8] sm:$0xff] 0.0
          %375 = vst [vmem:[#allocation4 + $0x1c0] sm:$0xff] 0.0
          %376 = vst [vmem:[#allocation4 + $0x1c8] sm:$0xff] 0.0
          %377 = vst [vmem:[#allocation4 + $0x1d0] sm:$0xff] 0.0
          %378 = vst [vmem:[#allocation4 + $0x1d8] sm:$0xff] 0.0
          %379 = vst [vmem:[#allocation4 + $0x1e0] sm:$0xff] 0.0
          %380 = vst [vmem:[#allocation4 + $0x1e8] sm:$0xff] 0.0
          %381 = vst [vmem:[#allocation4 + $0x1f0] sm:$0xff] 0.0
          %382 = vst [vmem:[#allocation4 + $0x1f8] sm:$0xff] 0.0
        $region48: #{tpu_custom_call.1} parent=31 // pred_fallthru
          _
        %v383 = vld [vmem:[%s228] sm:$0xff]
        %v384 = vld [vmem:[%s228 + $0x8] sm:$0xff]
        %v385 = vld [vmem:[%s228 + $0x10] sm:$0xff]
        %v386 = vld [vmem:[%s228 + $0x18] sm:$0xff]
        %v387 = vld [vmem:[%s228 + $0x20] sm:$0xff]
        %v388 = vld [vmem:[%s228 + $0x28] sm:$0xff]
        %v389 = vld [vmem:[%s228 + $0x30] sm:$0xff]
        %v390 = vld [vmem:[%s228 + $0x38] sm:$0xff]
        %v391 = vld [vmem:[%s228 + $0x40] sm:$0xff]
        %v392 = vld [vmem:[%s228 + $0x48] sm:$0xff]
        %v393 = vld [vmem:[%s228 + $0x50] sm:$0xff]
        %v394 = vld [vmem:[%s228 + $0x58] sm:$0xff]
        %v395 = vld [vmem:[%s228 + $0x60] sm:$0xff]
        %v396 = vld [vmem:[%s228 + $0x68] sm:$0xff]
        %v397 = vld [vmem:[%s228 + $0x70] sm:$0xff]
        %v398 = vld [vmem:[%s228 + $0x78] sm:$0xff]
        %v399 = vld [vmem:[%s228 + $0x80] sm:$0xff]
        %v400 = vld [vmem:[%s228 + $0x88] sm:$0xff]
        %v401 = vld [vmem:[%s228 + $0x90] sm:$0xff]
        %v402 = vld [vmem:[%s228 + $0x98] sm:$0xff]
        %v403 = vld [vmem:[%s228 + $0xa0] sm:$0xff]
        %v404 = vld [vmem:[%s228 + $0xa8] sm:$0xff]
        %v405 = vld [vmem:[%s228 + $0xb0] sm:$0xff]
        %v406 = vld [vmem:[%s228 + $0xb8] sm:$0xff]
        %v407 = vld [vmem:[%s228 + $0xc0] sm:$0xff]
        %v408 = vld [vmem:[%s228 + $0xc8] sm:$0xff]
        %v409 = vld [vmem:[%s228 + $0xd0] sm:$0xff]
        %v410 = vld [vmem:[%s228 + $0xd8] sm:$0xff]
        %v411 = vld [vmem:[%s228 + $0xe0] sm:$0xff]
        %v412 = vld [vmem:[%s228 + $0xe8] sm:$0xff]
        %v413 = vld [vmem:[%s228 + $0xf0] sm:$0xff]
        %v414 = vld [vmem:[%s228 + $0xf8] sm:$0xff]
        %v415 = vld [vmem:[%s228 + $0x100] sm:$0xff]
        %v416 = vld [vmem:[%s228 + $0x108] sm:$0xff]
        %v417 = vld [vmem:[%s228 + $0x110] sm:$0xff]
        %v418 = vld [vmem:[%s228 + $0x118] sm:$0xff]
        %v419 = vld [vmem:[%s228 + $0x120] sm:$0xff]
        %v420 = vld [vmem:[%s228 + $0x128] sm:$0xff]
        %v421 = vld [vmem:[%s228 + $0x130] sm:$0xff]
        %v422 = vld [vmem:[%s228 + $0x138] sm:$0xff]
        %v423 = vld [vmem:[%s228 + $0x140] sm:$0xff]
        %v424 = vld [vmem:[%s228 + $0x148] sm:$0xff]
        %v425 = vld [vmem:[%s228 + $0x150] sm:$0xff]
        %v426 = vld [vmem:[%s228 + $0x158] sm:$0xff]
        %v427 = vld [vmem:[%s228 + $0x160] sm:$0xff]
        %v428 = vld [vmem:[%s228 + $0x168] sm:$0xff]
        %v429 = vld [vmem:[%s228 + $0x170] sm:$0xff]
        %v430 = vld [vmem:[%s228 + $0x178] sm:$0xff]
        %v431 = vld [vmem:[%s228 + $0x180] sm:$0xff]
        %v432 = vld [vmem:[%s228 + $0x188] sm:$0xff]
        %v433 = vld [vmem:[%s228 + $0x190] sm:$0xff]
        %v434 = vld [vmem:[%s228 + $0x198] sm:$0xff]
        %v435 = vld [vmem:[%s228 + $0x1a0] sm:$0xff]
        %v436 = vld [vmem:[%s228 + $0x1a8] sm:$0xff]
        %v437 = vld [vmem:[%s228 + $0x1b0] sm:$0xff]
        %v438 = vld [vmem:[%s228 + $0x1b8] sm:$0xff]
        %v439 = vld [vmem:[%s228 + $0x1c0] sm:$0xff]
        %v440 = vld [vmem:[%s228 + $0x1c8] sm:$0xff]
        %v441 = vld [vmem:[%s228 + $0x1d0] sm:$0xff]
        %v442 = vld [vmem:[%s228 + $0x1d8] sm:$0xff]
        %v443 = vld [vmem:[%s228 + $0x1e0] sm:$0xff]
        %v444 = vld [vmem:[%s228 + $0x1e8] sm:$0xff]
        %v445 = vld [vmem:[%s228 + $0x1f0] sm:$0xff]
        %v446 = vld [vmem:[%s228 + $0x1f8] sm:$0xff]
        %v447 = vld [vmem:[%s237] sm:$0xff]
        %v448 = vld [vmem:[%s237 + $0x8] sm:$0xff]
        %v449 = vld [vmem:[%s237 + $0x10] sm:$0xff]
        %v450 = vld [vmem:[%s237 + $0x18] sm:$0xff]
        %v451 = vld [vmem:[%s237 + $0x20] sm:$0xff]
        %v452 = vld [vmem:[%s237 + $0x28] sm:$0xff]
        %v453 = vld [vmem:[%s237 + $0x30] sm:$0xff]
        %v454 = vld [vmem:[%s237 + $0x38] sm:$0xff]
        %v455 = vld [vmem:[%s237 + $0x40] sm:$0xff]
        %v456 = vld [vmem:[%s237 + $0x48] sm:$0xff]
        %v457 = vld [vmem:[%s237 + $0x50] sm:$0xff]
        %v458 = vld [vmem:[%s237 + $0x58] sm:$0xff]
        %v459 = vld [vmem:[%s237 + $0x60] sm:$0xff]
        %v460 = vld [vmem:[%s237 + $0x68] sm:$0xff]
        %v461 = vld [vmem:[%s237 + $0x70] sm:$0xff]
        %v462 = vld [vmem:[%s237 + $0x78] sm:$0xff]
        %v463 = vld [vmem:[%s237 + $0x80] sm:$0xff]
        %v464 = vld [vmem:[%s237 + $0x88] sm:$0xff]
        %v465 = vld [vmem:[%s237 + $0x90] sm:$0xff]
        %v466 = vld [vmem:[%s237 + $0x98] sm:$0xff]
        %v467 = vld [vmem:[%s237 + $0xa0] sm:$0xff]
        %v468 = vld [vmem:[%s237 + $0xa8] sm:$0xff]
        %v469 = vld [vmem:[%s237 + $0xb0] sm:$0xff]
        %v470 = vld [vmem:[%s237 + $0xb8] sm:$0xff]
        %v471 = vld [vmem:[%s237 + $0xc0] sm:$0xff]
        %v472 = vld [vmem:[%s237 + $0xc8] sm:$0xff]
        %v473 = vld [vmem:[%s237 + $0xd0] sm:$0xff]
        %v474 = vld [vmem:[%s237 + $0xd8] sm:$0xff]
        %v475 = vld [vmem:[%s237 + $0xe0] sm:$0xff]
        %v476 = vld [vmem:[%s237 + $0xe8] sm:$0xff]
        %v477 = vld [vmem:[%s237 + $0xf0] sm:$0xff]
        %v478 = vld [vmem:[%s237 + $0xf8] sm:$0xff]
        %v479 = vld [vmem:[%s237 + $0x100] sm:$0xff]
        %v480 = vld [vmem:[%s237 + $0x108] sm:$0xff]
        %v481 = vld [vmem:[%s237 + $0x110] sm:$0xff]
        %v482 = vld [vmem:[%s237 + $0x118] sm:$0xff]
        %v483 = vld [vmem:[%s237 + $0x120] sm:$0xff]
        %v484 = vld [vmem:[%s237 + $0x128] sm:$0xff]
        %v485 = vld [vmem:[%s237 + $0x130] sm:$0xff]
        %v486 = vld [vmem:[%s237 + $0x138] sm:$0xff]
        %v487 = vld [vmem:[%s237 + $0x140] sm:$0xff]
        %v488 = vld [vmem:[%s237 + $0x148] sm:$0xff]
        %v489 = vld [vmem:[%s237 + $0x150] sm:$0xff]
        %v490 = vld [vmem:[%s237 + $0x158] sm:$0xff]
        %v491 = vld [vmem:[%s237 + $0x160] sm:$0xff]
        %v492 = vld [vmem:[%s237 + $0x168] sm:$0xff]
        %v493 = vld [vmem:[%s237 + $0x170] sm:$0xff]
        %v494 = vld [vmem:[%s237 + $0x178] sm:$0xff]
        %v495 = vld [vmem:[%s237 + $0x180] sm:$0xff]
        %v496 = vld [vmem:[%s237 + $0x188] sm:$0xff]
        %v497 = vld [vmem:[%s237 + $0x190] sm:$0xff]
        %v498 = vld [vmem:[%s237 + $0x198] sm:$0xff]
        %v499 = vld [vmem:[%s237 + $0x1a0] sm:$0xff]
        %v500 = vld [vmem:[%s237 + $0x1a8] sm:$0xff]
        %v501 = vld [vmem:[%s237 + $0x1b0] sm:$0xff]
        %v502 = vld [vmem:[%s237 + $0x1b8] sm:$0xff]
        %v503 = vld [vmem:[%s237 + $0x1c0] sm:$0xff]
        %v504 = vld [vmem:[%s237 + $0x1c8] sm:$0xff]
        %v505 = vld [vmem:[%s237 + $0x1d0] sm:$0xff]
        %v506 = vld [vmem:[%s237 + $0x1d8] sm:$0xff]
        %v507 = vld [vmem:[%s237 + $0x1e0] sm:$0xff]
        %v508 = vld [vmem:[%s237 + $0x1e8] sm:$0xff]
        %v509 = vld [vmem:[%s237 + $0x1f0] sm:$0xff]
        %v510 = vld [vmem:[%s237 + $0x1f8] sm:$0xff]
        %511 = vmatprep.subr.mxu0 0.0
        %512 = vmatpush1.msra.mxu0 %v462
        %513 = vmatprep.subr.mxu0 0.0
        %514 = vmatpush1.msra.mxu0 %v461
        %515 = vmatprep.subr.mxu0 0.0
        %516 = vmatpush1.msra.mxu0 %v460
        %517 = vmatprep.subr.mxu0 0.0
        %518 = vmatpush1.msra.mxu0 %v459
        %519 = vmatprep.subr.mxu0 0.0
        %520 = vmatpush1.msra.mxu0 %v458
        %521 = vmatprep.subr.mxu0 0.0
        %522 = vmatpush1.msra.mxu0 %v457
        %523 = vmatprep.subr.mxu0 0.0
        %524 = vmatpush1.msra.mxu0 %v456
        %525 = vmatprep.subr.mxu0 0.0
        %526 = vmatpush1.msra.mxu0 %v455
        %527 = vmatprep.subr.mxu0 0.0
        %528 = vmatpush1.msra.mxu0 %v454
        %529 = vmatprep.subr.mxu0 0.0
        %530 = vmatpush1.msra.mxu0 %v453
        %531 = vmatprep.subr.mxu0 0.0
        %532 = vmatpush1.msra.mxu0 %v452
        %533 = vmatprep.subr.mxu0 0.0
        %534 = vmatpush1.msra.mxu0 %v451
        %535 = vmatprep.subr.mxu0 0.0
        %536 = vmatpush1.msra.mxu0 %v450
        %537 = vmatprep.subr.mxu0 0.0
        %538 = vmatpush1.msra.mxu0 %v449
        %539 = vmatprep.subr.mxu0 0.0
        %540 = vmatpush1.msra.mxu0 %v448
        %541 = vmatprep.subr.mxu0 0.0
        %542 = vmatpush1.msra.mxu0 %v447
        %543 = vmatprep.subr.mxu0 0.0
        %544 = vmatpush2.msra.mxu0 %v478
        %545 = vmatprep.subr.mxu0 0.0
        %546 = vmatpush2.msra.mxu0 %v477
        %547 = vmatprep.subr.mxu0 0.0
        %548 = vmatpush2.msra.mxu0 %v476
        %549 = vmatprep.subr.mxu0 0.0
        %550 = vmatpush2.msra.mxu0 %v475
        %551 = vmatprep.subr.mxu0 0.0
        %552 = vmatpush2.msra.mxu0 %v474
        %553 = vmatprep.subr.mxu0 0.0
        %554 = vmatpush2.msra.mxu0 %v473
        %555 = vmatprep.subr.mxu0 0.0
        %556 = vmatpush2.msra.mxu0 %v472
        %557 = vmatprep.subr.mxu0 0.0
        %558 = vmatpush2.msra.mxu0 %v471
        %559 = vmatprep.subr.mxu0 0.0
        %560 = vmatpush2.msra.mxu0 %v470
        %561 = vmatprep.subr.mxu0 0.0
        %562 = vmatpush2.msra.mxu0 %v469
        %563 = vmatprep.subr.mxu0 0.0
        %564 = vmatpush2.msra.mxu0 %v468
        %565 = vmatprep.subr.mxu0 0.0
        %566 = vmatpush2.msra.mxu0 %v467
        %567 = vmatprep.subr.mxu0 0.0
        %568 = vmatpush2.msra.mxu0 %v466
        %569 = vmatprep.subr.mxu0 0.0
        %570 = vmatpush2.msra.mxu0 %v465
        %571 = vmatprep.subr.mxu0 0.0
        %572 = vmatpush2.msra.mxu0 %v464
        %573 = vmatprep.subr.mxu0 0.0
        %574 = vmatpush2.msra.mxu0 %v463
        %575 = vmatprep.mubr.f32.mxu0 %v384
        %576 = vmatmul.mubr.f32.gmra.mxu0 %v383
        %v577 = vpop.f32.mrf.mxu0
        %v578 = vadd.f32 0.0, %v577
        %v579 = vpop.f32.mrf.mxu0
        %580 = vmatprep.mubr.f32.mxu0 %v388
        %581 = vmatmul.mubr.f32.gmra.mxu0 %v387
        %v582 = vpop.f32.mrf.mxu0
        %v583 = vadd.f32 0.0, %v582
        %v584 = vpop.f32.mrf.mxu0
        %585 = vmatprep.mubr.f32.mxu0 %v392
        %586 = vmatmul.mubr.f32.gmra.mxu0 %v391
        %v587 = vpop.f32.mrf.mxu0
        %v588 = vadd.f32 0.0, %v587
        %v589 = vpop.f32.mrf.mxu0
        %590 = vmatprep.mubr.f32.mxu0 %v396
        %591 = vmatmul.mubr.f32.gmra.mxu0 %v395
        %v592 = vpop.f32.mrf.mxu0
        %v593 = vadd.f32 0.0, %v592
        %v594 = vpop.f32.mrf.mxu0
        %595 = vmatprep.mubr.f32.mxu0 %v400
        %596 = vmatmul.mubr.f32.gmra.mxu0 %v399
        %v597 = vpop.f32.mrf.mxu0
        %v598 = vadd.f32 0.0, %v597
        %v599 = vpop.f32.mrf.mxu0
        %600 = vmatprep.mubr.f32.mxu0 %v404
        %601 = vmatmul.mubr.f32.gmra.mxu0 %v403
        %v602 = vpop.f32.mrf.mxu0
        %v603 = vadd.f32 0.0, %v602
        %v604 = vpop.f32.mrf.mxu0
        %605 = vmatprep.mubr.f32.mxu0 %v408
        %606 = vmatmul.mubr.f32.gmra.mxu0 %v407
        %v607 = vpop.f32.mrf.mxu0
        %v608 = vadd.f32 0.0, %v607
        %v609 = vpop.f32.mrf.mxu0
        %610 = vmatprep.mubr.f32.mxu0 %v412
        %611 = vmatmul.mubr.f32.gmra.mxu0 %v411
        %v612 = vpop.f32.mrf.mxu0
        %v613 = vadd.f32 0.0, %v612
        %v614 = vpop.f32.mrf.mxu0
        %615 = vmatprep.mubr.f32.mxu0 %v416
        %616 = vmatmul.mubr.f32.gmra.mxu0 %v415
        %v617 = vpop.f32.mrf.mxu0
        %v618 = vadd.f32 0.0, %v617
        %v619 = vpop.f32.mrf.mxu0
        %620 = vmatprep.mubr.f32.mxu0 %v420
        %621 = vmatmul.mubr.f32.gmra.mxu0 %v419
        %v622 = vpop.f32.mrf.mxu0
        %v623 = vadd.f32 0.0, %v622
        %v624 = vpop.f32.mrf.mxu0
        %625 = vmatprep.mubr.f32.mxu0 %v424
        %626 = vmatmul.mubr.f32.gmra.mxu0 %v423
        %v627 = vpop.f32.mrf.mxu0
        %v628 = vadd.f32 0.0, %v627
        %v629 = vpop.f32.mrf.mxu0
        %630 = vmatprep.mubr.f32.mxu0 %v428
        %631 = vmatmul.mubr.f32.gmra.mxu0 %v427
        %v632 = vpop.f32.mrf.mxu0
        %v633 = vadd.f32 0.0, %v632
        %v634 = vpop.f32.mrf.mxu0
        %635 = vmatprep.mubr.f32.mxu0 %v432
        %636 = vmatmul.mubr.f32.gmra.mxu0 %v431
        %v637 = vpop.f32.mrf.mxu0
        %v638 = vadd.f32 0.0, %v637
        %v639 = vpop.f32.mrf.mxu0
        %640 = vmatprep.mubr.f32.mxu0 %v436
        %641 = vmatmul.mubr.f32.gmra.mxu0 %v435
        %v642 = vpop.f32.mrf.mxu0
        %v643 = vadd.f32 0.0, %v642
        %v644 = vpop.f32.mrf.mxu0
        %645 = vmatprep.mubr.f32.mxu0 %v440
        %646 = vmatmul.mubr.f32.gmra.mxu0 %v439
        %v647 = vpop.f32.mrf.mxu0
        %v648 = vadd.f32 0.0, %v647
        %v649 = vpop.f32.mrf.mxu0
        %650 = vmatprep.mubr.f32.mxu0 %v444
        %651 = vmatmul.mubr.f32.gmra.mxu0 %v443
        %v652 = vpop.f32.mrf.mxu0
        %v653 = vadd.f32 0.0, %v652
        %v654 = vpop.f32.mrf.mxu0
        %655 = vdwg.mxu0
        %656 = vmatprep.subr.mxu0 0.0
        %657 = vmatpush1.msra.mxu0 %v494
        %658 = vmatprep.subr.mxu0 0.0
        %659 = vmatpush1.msra.mxu0 %v493
        %660 = vmatprep.subr.mxu0 0.0
        %661 = vmatpush1.msra.mxu0 %v492
        %662 = vmatprep.subr.mxu0 0.0
        %663 = vmatpush1.msra.mxu0 %v491
        %664 = vmatprep.subr.mxu0 0.0
        %665 = vmatpush1.msra.mxu0 %v490
        %666 = vmatprep.subr.mxu0 0.0
        %667 = vmatpush1.msra.mxu0 %v489
        %668 = vmatprep.subr.mxu0 0.0
        %669 = vmatpush1.msra.mxu0 %v488
        %670 = vmatprep.subr.mxu0 0.0
        %671 = vmatpush1.msra.mxu0 %v487
        %672 = vmatprep.subr.mxu0 0.0
        %673 = vmatpush1.msra.mxu0 %v486
        %674 = vmatprep.subr.mxu0 0.0
        %675 = vmatpush1.msra.mxu0 %v485
        %676 = vmatprep.subr.mxu0 0.0
        %677 = vmatpush1.msra.mxu0 %v484
        %678 = vmatprep.subr.mxu0 0.0
        %679 = vmatpush1.msra.mxu0 %v483
        %680 = vmatprep.subr.mxu0 0.0
        %681 = vmatpush1.msra.mxu0 %v482
        %682 = vmatprep.subr.mxu0 0.0
        %683 = vmatpush1.msra.mxu0 %v481
        %684 = vmatprep.subr.mxu0 0.0
        %685 = vmatpush1.msra.mxu0 %v480
        %686 = vmatprep.subr.mxu0 0.0
        %687 = vmatpush1.msra.mxu0 %v479
        %688 = vmatprep.subr.mxu0 0.0
        %689 = vmatpush2.msra.mxu0 %v510
        %690 = vmatprep.subr.mxu0 0.0
        %691 = vmatpush2.msra.mxu0 %v509
        %692 = vmatprep.subr.mxu0 0.0
        %693 = vmatpush2.msra.mxu0 %v508
        %694 = vmatprep.subr.mxu0 0.0
        %695 = vmatpush2.msra.mxu0 %v507
        %696 = vmatprep.subr.mxu0 0.0
        %697 = vmatpush2.msra.mxu0 %v506
        %698 = vmatprep.subr.mxu0 0.0
        %699 = vmatpush2.msra.mxu0 %v505
        %700 = vmatprep.subr.mxu0 0.0
        %701 = vmatpush2.msra.mxu0 %v504
        %702 = vmatprep.subr.mxu0 0.0
        %703 = vmatpush2.msra.mxu0 %v503
        %704 = vmatprep.subr.mxu0 0.0
        %705 = vmatpush2.msra.mxu0 %v502
        %706 = vmatprep.subr.mxu0 0.0
        %707 = vmatpush2.msra.mxu0 %v501
        %708 = vmatprep.subr.mxu0 0.0
        %709 = vmatpush2.msra.mxu0 %v500
        %710 = vmatprep.subr.mxu0 0.0
        %711 = vmatpush2.msra.mxu0 %v499
        %712 = vmatprep.subr.mxu0 0.0
        %713 = vmatpush2.msra.mxu0 %v498
        %714 = vmatprep.subr.mxu0 0.0
        %715 = vmatpush2.msra.mxu0 %v497
        %716 = vmatprep.subr.mxu0 0.0
        %717 = vmatpush2.msra.mxu0 %v496
        %718 = vmatprep.subr.mxu0 0.0
        %719 = vmatpush2.msra.mxu0 %v495
        %720 = vmatprep.mubr.f32.mxu0 %v386
        %721 = vmatmul.mubr.f32.gmra.mxu0 %v385
        %v722 = vpop.f32.mrf.mxu0
        %v723 = vadd.f32 %v578, %v722
        %v724 = vpop.f32.mrf.mxu0
        %725 = vmatprep.mubr.f32.mxu0 %v390
        %726 = vmatmul.mubr.f32.gmra.mxu0 %v389
        %v727 = vpop.f32.mrf.mxu0
        %v728 = vadd.f32 %v583, %v727
        %v729 = vpop.f32.mrf.mxu0
        %730 = vmatprep.mubr.f32.mxu0 %v394
        %731 = vmatmul.mubr.f32.gmra.mxu0 %v393
        %v732 = vpop.f32.mrf.mxu0
        %v733 = vadd.f32 %v588, %v732
        %v734 = vpop.f32.mrf.mxu0
        %735 = vmatprep.mubr.f32.mxu0 %v398
        %736 = vmatmul.mubr.f32.gmra.mxu0 %v397
        %v737 = vpop.f32.mrf.mxu0
        %v738 = vadd.f32 %v593, %v737
        %v739 = vpop.f32.mrf.mxu0
        %740 = vmatprep.mubr.f32.mxu0 %v402
        %741 = vmatmul.mubr.f32.gmra.mxu0 %v401
        %v742 = vpop.f32.mrf.mxu0
        %v743 = vadd.f32 %v598, %v742
        %v744 = vpop.f32.mrf.mxu0
        %745 = vmatprep.mubr.f32.mxu0 %v406
        %746 = vmatmul.mubr.f32.gmra.mxu0 %v405
        %v747 = vpop.f32.mrf.mxu0
        %v748 = vadd.f32 %v603, %v747
        %v749 = vpop.f32.mrf.mxu0
        %750 = vmatprep.mubr.f32.mxu0 %v410
        %751 = vmatmul.mubr.f32.gmra.mxu0 %v409
        %v752 = vpop.f32.mrf.mxu0
        %v753 = vadd.f32 %v608, %v752
        %v754 = vpop.f32.mrf.mxu0
        %755 = vmatprep.mubr.f32.mxu0 %v414
        %756 = vmatmul.mubr.f32.gmra.mxu0 %v413
        %v757 = vpop.f32.mrf.mxu0
        %v758 = vadd.f32 %v613, %v757
        %v759 = vpop.f32.mrf.mxu0
        %760 = vmatprep.mubr.f32.mxu0 %v418
        %761 = vmatmul.mubr.f32.gmra.mxu0 %v417
        %v762 = vpop.f32.mrf.mxu0
        %v763 = vadd.f32 %v618, %v762
        %v764 = vpop.f32.mrf.mxu0
        %765 = vmatprep.mubr.f32.mxu0 %v422
        %766 = vmatmul.mubr.f32.gmra.mxu0 %v421
        %v767 = vpop.f32.mrf.mxu0
        %v768 = vadd.f32 %v623, %v767
        %v769 = vpop.f32.mrf.mxu0
        %770 = vmatprep.mubr.f32.mxu0 %v426
        %771 = vmatmul.mubr.f32.gmra.mxu0 %v425
        %v772 = vpop.f32.mrf.mxu0
        %v773 = vadd.f32 %v628, %v772
        %v774 = vpop.f32.mrf.mxu0
        %775 = vmatprep.mubr.f32.mxu0 %v430
        %776 = vmatmul.mubr.f32.gmra.mxu0 %v429
        %v777 = vpop.f32.mrf.mxu0
        %v778 = vadd.f32 %v633, %v777
        %v779 = vpop.f32.mrf.mxu0
        %780 = vmatprep.mubr.f32.mxu0 %v434
        %781 = vmatmul.mubr.f32.gmra.mxu0 %v433
        %v782 = vpop.f32.mrf.mxu0
        %v783 = vadd.f32 %v638, %v782
        %v784 = vpop.f32.mrf.mxu0
        %785 = vmatprep.mubr.f32.mxu0 %v438
        %786 = vmatmul.mubr.f32.gmra.mxu0 %v437
        %v787 = vpop.f32.mrf.mxu0
        %v788 = vadd.f32 %v643, %v787
        %v789 = vpop.f32.mrf.mxu0
        %790 = vmatprep.mubr.f32.mxu0 %v442
        %791 = vmatmul.mubr.f32.gmra.mxu0 %v441
        %v792 = vpop.f32.mrf.mxu0
        %v793 = vadd.f32 %v648, %v792
        %v794 = vpop.f32.mrf.mxu0
        %795 = vmatprep.mubr.f32.mxu0 %v446
        %796 = vmatmul.mubr.f32.gmra.mxu0 %v445
        %v797 = vpop.f32.mrf.mxu0
        %v798 = vadd.f32 %v653, %v797
        %v799 = vpop.f32.mrf.mxu0
        %800 = vdwg.mxu0
        %v801 = vld [vmem:[#allocation2] sm:$0xff]
        %v802 = vld [vmem:[#allocation2 + $0x8] sm:$0xff]
        %v803 = vld [vmem:[#allocation2 + $0x10] sm:$0xff]
        %v804 = vld [vmem:[#allocation2 + $0x18] sm:$0xff]
        %v805 = vld [vmem:[#allocation2 + $0x20] sm:$0xff]
        %v806 = vld [vmem:[#allocation2 + $0x28] sm:$0xff]
        %v807 = vld [vmem:[#allocation2 + $0x30] sm:$0xff]
        %v808 = vld [vmem:[#allocation2 + $0x38] sm:$0xff]
        %v809 = vld [vmem:[#allocation2 + $0x40] sm:$0xff]
        %v810 = vld [vmem:[#allocation2 + $0x48] sm:$0xff]
        %v811 = vld [vmem:[#allocation2 + $0x50] sm:$0xff]
        %v812 = vld [vmem:[#allocation2 + $0x58] sm:$0xff]
        %v813 = vld [vmem:[#allocation2 + $0x60] sm:$0xff]
        %v814 = vld [vmem:[#allocation2 + $0x68] sm:$0xff]
        %v815 = vld [vmem:[#allocation2 + $0x70] sm:$0xff]
        %v816 = vld [vmem:[#allocation2 + $0x78] sm:$0xff]
        %817 = vmax.xlane.f32.xlu0 %v723
        %v818 = vpop.xlane.xlu0 %817
        %819 = vmax.xlane.f32.xlu0 %v728
        %v820 = vpop.xlane.xlu0 %819
        %821 = vmax.xlane.f32.xlu0 %v733
        %v822 = vpop.xlane.xlu0 %821
        %823 = vmax.xlane.f32.xlu0 %v738
        %v824 = vpop.xlane.xlu0 %823
        %825 = vmax.xlane.f32.xlu0 %v743
        %v826 = vpop.xlane.xlu0 %825
        %827 = vmax.xlane.f32.xlu0 %v748
        %v828 = vpop.xlane.xlu0 %827
        %829 = vmax.xlane.f32.xlu0 %v753
        %v830 = vpop.xlane.xlu0 %829
        %831 = vmax.xlane.f32.xlu0 %v758
        %v832 = vpop.xlane.xlu0 %831
        %833 = vmax.xlane.f32.xlu0 %v763
        %v834 = vpop.xlane.xlu0 %833
        %835 = vmax.xlane.f32.xlu0 %v768
        %v836 = vpop.xlane.xlu0 %835
        %837 = vmax.xlane.f32.xlu0 %v773
        %v838 = vpop.xlane.xlu0 %837
        %839 = vmax.xlane.f32.xlu0 %v778
        %v840 = vpop.xlane.xlu0 %839
        %841 = vmax.xlane.f32.xlu0 %v783
        %v842 = vpop.xlane.xlu0 %841
        %843 = vmax.xlane.f32.xlu0 %v788
        %v844 = vpop.xlane.xlu0 %843
        %845 = vmax.xlane.f32.xlu0 %v793
        %v846 = vpop.xlane.xlu0 %845
        %847 = vmax.xlane.f32.xlu0 %v798
        %v848 = vpop.xlane.xlu0 %847
        %v849 = vmax.f32 %v801, %v818
        %v850 = vmax.f32 %v802, %v820
        %v851 = vmax.f32 %v803, %v822
        %v852 = vmax.f32 %v804, %v824
        %v853 = vmax.f32 %v805, %v826
        %v854 = vmax.f32 %v806, %v828
        %v855 = vmax.f32 %v807, %v830
        %v856 = vmax.f32 %v808, %v832
        %v857 = vmax.f32 %v809, %v834
        %v858 = vmax.f32 %v810, %v836
        %v859 = vmax.f32 %v811, %v838
        %v860 = vmax.f32 %v812, %v840
        %v861 = vmax.f32 %v813, %v842
        %v862 = vmax.f32 %v814, %v844
        %v863 = vmax.f32 %v815, %v846
        %v864 = vmax.f32 %v816, %v848
        %v865 = vsub.f32 %v801, %v849
        %v866 = vsub.f32 %v802, %v850
        %v867 = vsub.f32 %v803, %v851
        %v868 = vsub.f32 %v804, %v852
        %v869 = vsub.f32 %v805, %v853
        %v870 = vsub.f32 %v806, %v854
        %v871 = vsub.f32 %v807, %v855
        %v872 = vsub.f32 %v808, %v856
        %v873 = vsub.f32 %v809, %v857
        %v874 = vsub.f32 %v810, %v858
        %v875 = vsub.f32 %v811, %v859
        %v876 = vsub.f32 %v812, %v860
        %v877 = vsub.f32 %v813, %v861
        %v878 = vsub.f32 %v814, %v862
        %v879 = vsub.f32 %v815, %v863
        %v880 = vsub.f32 %v816, %v864
        %v881 = vmul.f32 %v865, 1.442695
        %v882 = vpow.pop %v881
        %v883 = vmul.f32 %v866, 1.442695
        %v884 = vpow.pop %v883
        %v885 = vmul.f32 %v867, 1.442695
        %v886 = vpow.pop %v885
        %v887 = vmul.f32 %v868, 1.442695
        %v888 = vpow.pop %v887
        %v889 = vmul.f32 %v869, 1.442695
        %v890 = vpow.pop %v889
        %v891 = vmul.f32 %v870, 1.442695
        %v892 = vpow.pop %v891
        %v893 = vmul.f32 %v871, 1.442695
        %v894 = vpow.pop %v893
        %v895 = vmul.f32 %v872, 1.442695
        %v896 = vpow.pop %v895
        %v897 = vmul.f32 %v873, 1.442695
        %v898 = vpow.pop %v897
        %v899 = vmul.f32 %v874, 1.442695
        %v900 = vpow.pop %v899
        %v901 = vmul.f32 %v875, 1.442695
        %v902 = vpow.pop %v901
        %v903 = vmul.f32 %v876, 1.442695
        %v904 = vpow.pop %v903
        %v905 = vmul.f32 %v877, 1.442695
        %v906 = vpow.pop %v905
        %v907 = vmul.f32 %v878, 1.442695
        %v908 = vpow.pop %v907
        %v909 = vmul.f32 %v879, 1.442695
        %v910 = vpow.pop %v909
        %v911 = vmul.f32 %v880, 1.442695
        %v912 = vpow.pop %v911
        %914 = vset.pattern.permute.xlu0 0
        %915 = vperm.xlu0 %914, %v849
        %v916 = vpop.permute.xlu0 %915
        %919 = vset.pattern.permute.xlu0 0
        %920 = vperm.xlu0 %919, %v850
        %v921 = vpop.permute.xlu0 %920
        %924 = vset.pattern.permute.xlu0 0
        %925 = vperm.xlu0 %924, %v851
        %v926 = vpop.permute.xlu0 %925
        %929 = vset.pattern.permute.xlu0 0
        %930 = vperm.xlu0 %929, %v852
        %v931 = vpop.permute.xlu0 %930
        %934 = vset.pattern.permute.xlu0 0
        %935 = vperm.xlu0 %934, %v853
        %v936 = vpop.permute.xlu0 %935
        %939 = vset.pattern.permute.xlu0 0
        %940 = vperm.xlu0 %939, %v854
        %v941 = vpop.permute.xlu0 %940
        %944 = vset.pattern.permute.xlu0 0
        %945 = vperm.xlu0 %944, %v855
        %v946 = vpop.permute.xlu0 %945
        %949 = vset.pattern.permute.xlu0 0
        %950 = vperm.xlu0 %949, %v856
        %v951 = vpop.permute.xlu0 %950
        %954 = vset.pattern.permute.xlu0 0
        %955 = vperm.xlu0 %954, %v857
        %v956 = vpop.permute.xlu0 %955
        %959 = vset.pattern.permute.xlu0 0
        %960 = vperm.xlu0 %959, %v858
        %v961 = vpop.permute.xlu0 %960
        %964 = vset.pattern.permute.xlu0 0
        %965 = vperm.xlu0 %964, %v859
        %v966 = vpop.permute.xlu0 %965
        %969 = vset.pattern.permute.xlu0 0
        %970 = vperm.xlu0 %969, %v860
        %v971 = vpop.permute.xlu0 %970
        %974 = vset.pattern.permute.xlu0 0
        %975 = vperm.xlu0 %974, %v861
        %v976 = vpop.permute.xlu0 %975
        %979 = vset.pattern.permute.xlu0 0
        %980 = vperm.xlu0 %979, %v862
        %v981 = vpop.permute.xlu0 %980
        %984 = vset.pattern.permute.xlu0 0
        %985 = vperm.xlu0 %984, %v863
        %v986 = vpop.permute.xlu0 %985
        %989 = vset.pattern.permute.xlu0 0
        %990 = vperm.xlu0 %989, %v864
        %v991 = vpop.permute.xlu0 %990
        %v993 = vsub.f32 %v723, %v916
        %v994 = vsub.f32 %v728, %v921
        %v995 = vsub.f32 %v733, %v926
        %v996 = vsub.f32 %v738, %v931
        %v997 = vsub.f32 %v743, %v936
        %v998 = vsub.f32 %v748, %v941
        %v999 = vsub.f32 %v753, %v946
        %v1000 = vsub.f32 %v758, %v951
        %v1001 = vsub.f32 %v763, %v956
        %v1002 = vsub.f32 %v768, %v961
        %v1003 = vsub.f32 %v773, %v966
        %v1004 = vsub.f32 %v778, %v971
        %v1005 = vsub.f32 %v783, %v976
        %v1006 = vsub.f32 %v788, %v981
        %v1007 = vsub.f32 %v793, %v986
        %v1008 = vsub.f32 %v798, %v991
        %v1009 = vmul.f32 %v993, 1.442695
        %v1010 = vpow.pop %v1009
        %v1011 = vmul.f32 %v994, 1.442695
        %v1012 = vpow.pop %v1011
        %v1013 = vmul.f32 %v995, 1.442695
        %v1014 = vpow.pop %v1013
        %v1015 = vmul.f32 %v996, 1.442695
        %v1016 = vpow.pop %v1015
        %v1017 = vmul.f32 %v997, 1.442695
        %v1018 = vpow.pop %v1017
        %v1019 = vmul.f32 %v998, 1.442695
        %v1020 = vpow.pop %v1019
        %v1021 = vmul.f32 %v999, 1.442695
        %v1022 = vpow.pop %v1021
        %v1023 = vmul.f32 %v1000, 1.442695
        %v1024 = vpow.pop %v1023
        %v1025 = vmul.f32 %v1001, 1.442695
        %v1026 = vpow.pop %v1025
        %v1027 = vmul.f32 %v1002, 1.442695
        %v1028 = vpow.pop %v1027
        %v1029 = vmul.f32 %v1003, 1.442695
        %v1030 = vpow.pop %v1029
        %v1031 = vmul.f32 %v1004, 1.442695
        %v1032 = vpow.pop %v1031
        %v1033 = vmul.f32 %v1005, 1.442695
        %v1034 = vpow.pop %v1033
        %v1035 = vmul.f32 %v1006, 1.442695
        %v1036 = vpow.pop %v1035
        %v1037 = vmul.f32 %v1007, 1.442695
        %v1038 = vpow.pop %v1037
        %v1039 = vmul.f32 %v1008, 1.442695
        %v1040 = vpow.pop %v1039
        %v1041 = vld [vmem:[#allocation3] sm:$0xff]
        %v1042 = vld [vmem:[#allocation3 + $0x8] sm:$0xff]
        %v1043 = vld [vmem:[#allocation3 + $0x10] sm:$0xff]
        %v1044 = vld [vmem:[#allocation3 + $0x18] sm:$0xff]
        %v1045 = vld [vmem:[#allocation3 + $0x20] sm:$0xff]
        %v1046 = vld [vmem:[#allocation3 + $0x28] sm:$0xff]
        %v1047 = vld [vmem:[#allocation3 + $0x30] sm:$0xff]
        %v1048 = vld [vmem:[#allocation3 + $0x38] sm:$0xff]
        %v1049 = vld [vmem:[#allocation3 + $0x40] sm:$0xff]
        %v1050 = vld [vmem:[#allocation3 + $0x48] sm:$0xff]
        %v1051 = vld [vmem:[#allocation3 + $0x50] sm:$0xff]
        %v1052 = vld [vmem:[#allocation3 + $0x58] sm:$0xff]
        %v1053 = vld [vmem:[#allocation3 + $0x60] sm:$0xff]
        %v1054 = vld [vmem:[#allocation3 + $0x68] sm:$0xff]
        %v1055 = vld [vmem:[#allocation3 + $0x70] sm:$0xff]
        %v1056 = vld [vmem:[#allocation3 + $0x78] sm:$0xff]
        %v1057 = vmul.f32 %v882, %v1041
        %v1058 = vmul.f32 %v884, %v1042
        %v1059 = vmul.f32 %v886, %v1043
        %v1060 = vmul.f32 %v888, %v1044
        %v1061 = vmul.f32 %v890, %v1045
        %v1062 = vmul.f32 %v892, %v1046
        %v1063 = vmul.f32 %v894, %v1047
        %v1064 = vmul.f32 %v896, %v1048
        %v1065 = vmul.f32 %v898, %v1049
        %v1066 = vmul.f32 %v900, %v1050
        %v1067 = vmul.f32 %v902, %v1051
        %v1068 = vmul.f32 %v904, %v1052
        %v1069 = vmul.f32 %v906, %v1053
        %v1070 = vmul.f32 %v908, %v1054
        %v1071 = vmul.f32 %v910, %v1055
        %v1072 = vmul.f32 %v912, %v1056
        %1073 = vadd.xlane.f32.xlu0 %v1010
        %v1074 = vpop.xlane.xlu0 %1073
        %1075 = vadd.xlane.f32.xlu0 %v1012
        %v1076 = vpop.xlane.xlu0 %1075
        %1077 = vadd.xlane.f32.xlu0 %v1014
        %v1078 = vpop.xlane.xlu0 %1077
        %1079 = vadd.xlane.f32.xlu0 %v1016
        %v1080 = vpop.xlane.xlu0 %1079
        %1081 = vadd.xlane.f32.xlu0 %v1018
        %v1082 = vpop.xlane.xlu0 %1081
        %1083 = vadd.xlane.f32.xlu0 %v1020
        %v1084 = vpop.xlane.xlu0 %1083
        %1085 = vadd.xlane.f32.xlu0 %v1022
        %v1086 = vpop.xlane.xlu0 %1085
        %1087 = vadd.xlane.f32.xlu0 %v1024
        %v1088 = vpop.xlane.xlu0 %1087
        %1089 = vadd.xlane.f32.xlu0 %v1026
        %v1090 = vpop.xlane.xlu0 %1089
        %1091 = vadd.xlane.f32.xlu0 %v1028
        %v1092 = vpop.xlane.xlu0 %1091
        %1093 = vadd.xlane.f32.xlu0 %v1030
        %v1094 = vpop.xlane.xlu0 %1093
        %1095 = vadd.xlane.f32.xlu0 %v1032
        %v1096 = vpop.xlane.xlu0 %1095
        %1097 = vadd.xlane.f32.xlu0 %v1034
        %v1098 = vpop.xlane.xlu0 %1097
        %1099 = vadd.xlane.f32.xlu0 %v1036
        %v1100 = vpop.xlane.xlu0 %1099
        %1101 = vadd.xlane.f32.xlu0 %v1038
        %v1102 = vpop.xlane.xlu0 %1101
        %1103 = vadd.xlane.f32.xlu0 %v1040
        %v1104 = vpop.xlane.xlu0 %1103
        %v1105 = vadd.f32 %v1057, %v1074
        %v1106 = vadd.f32 %v1058, %v1076
        %v1107 = vadd.f32 %v1059, %v1078
        %v1108 = vadd.f32 %v1060, %v1080
        %v1109 = vadd.f32 %v1061, %v1082
        %v1110 = vadd.f32 %v1062, %v1084
        %v1111 = vadd.f32 %v1063, %v1086
        %v1112 = vadd.f32 %v1064, %v1088
        %v1113 = vadd.f32 %v1065, %v1090
        %v1114 = vadd.f32 %v1066, %v1092
        %v1115 = vadd.f32 %v1067, %v1094
        %v1116 = vadd.f32 %v1068, %v1096
        %v1117 = vadd.f32 %v1069, %v1098
        %v1118 = vadd.f32 %v1070, %v1100
        %v1119 = vadd.f32 %v1071, %v1102
        %v1120 = vadd.f32 %v1072, %v1104
        %vm1121 = vcmask 7168
        %1122 = vst.msk [vmem:[#allocation3] sm:$0xff] %vm1121, %v1105
        %1123 = vst.msk [vmem:[#allocation3 + $0x8] sm:$0xff] %vm1121, %v1106
        %1124 = vst.msk [vmem:[#allocation3 + $0x10] sm:$0xff] %vm1121, %v1107
        %1125 = vst.msk [vmem:[#allocation3 + $0x18] sm:$0xff] %vm1121, %v1108
        %1126 = vst.msk [vmem:[#allocation3 + $0x20] sm:$0xff] %vm1121, %v1109
        %1127 = vst.msk [vmem:[#allocation3 + $0x28] sm:$0xff] %vm1121, %v1110
        %1128 = vst.msk [vmem:[#allocation3 + $0x30] sm:$0xff] %vm1121, %v1111
        %1129 = vst.msk [vmem:[#allocation3 + $0x38] sm:$0xff] %vm1121, %v1112
        %1130 = vst.msk [vmem:[#allocation3 + $0x40] sm:$0xff] %vm1121, %v1113
        %1131 = vst.msk [vmem:[#allocation3 + $0x48] sm:$0xff] %vm1121, %v1114
        %1132 = vst.msk [vmem:[#allocation3 + $0x50] sm:$0xff] %vm1121, %v1115
        %1133 = vst.msk [vmem:[#allocation3 + $0x58] sm:$0xff] %vm1121, %v1116
        %1134 = vst.msk [vmem:[#allocation3 + $0x60] sm:$0xff] %vm1121, %v1117
        %1135 = vst.msk [vmem:[#allocation3 + $0x68] sm:$0xff] %vm1121, %v1118
        %1136 = vst.msk [vmem:[#allocation3 + $0x70] sm:$0xff] %vm1121, %v1119
        %1137 = vst.msk [vmem:[#allocation3 + $0x78] sm:$0xff] %vm1121, %v1120
        %v1138 = vld [vmem:[#allocation4] sm:$0xff]
        %v1139 = vld [vmem:[#allocation4 + $0x8] sm:$0xff]
        %v1140 = vld [vmem:[#allocation4 + $0x10] sm:$0xff]
        %v1141 = vld [vmem:[#allocation4 + $0x18] sm:$0xff]
        %v1142 = vld [vmem:[#allocation4 + $0x20] sm:$0xff]
        %v1143 = vld [vmem:[#allocation4 + $0x28] sm:$0xff]
        %v1144 = vld [vmem:[#allocation4 + $0x30] sm:$0xff]
        %v1145 = vld [vmem:[#allocation4 + $0x38] sm:$0xff]
        %v1146 = vld [vmem:[#allocation4 + $0x40] sm:$0xff]
        %v1147 = vld [vmem:[#allocation4 + $0x48] sm:$0xff]
        %v1148 = vld [vmem:[#allocation4 + $0x50] sm:$0xff]
        %v1149 = vld [vmem:[#allocation4 + $0x58] sm:$0xff]
        %v1150 = vld [vmem:[#allocation4 + $0x60] sm:$0xff]
        %v1151 = vld [vmem:[#allocation4 + $0x68] sm:$0xff]
        %v1152 = vld [vmem:[#allocation4 + $0x70] sm:$0xff]
        %v1153 = vld [vmem:[#allocation4 + $0x78] sm:$0xff]
        %v1154 = vld [vmem:[#allocation4 + $0x80] sm:$0xff]
        %v1155 = vld [vmem:[#allocation4 + $0x88] sm:$0xff]
        %v1156 = vld [vmem:[#allocation4 + $0x90] sm:$0xff]
        %v1157 = vld [vmem:[#allocation4 + $0x98] sm:$0xff]
        %v1158 = vld [vmem:[#allocation4 + $0xa0] sm:$0xff]
        %v1159 = vld [vmem:[#allocation4 + $0xa8] sm:$0xff]
        %v1160 = vld [vmem:[#allocation4 + $0xb0] sm:$0xff]
        %v1161 = vld [vmem:[#allocation4 + $0xb8] sm:$0xff]
        %v1162 = vld [vmem:[#allocation4 + $0xc0] sm:$0xff]
        %v1163 = vld [vmem:[#allocation4 + $0xc8] sm:$0xff]
        %v1164 = vld [vmem:[#allocation4 + $0xd0] sm:$0xff]
        %v1165 = vld [vmem:[#allocation4 + $0xd8] sm:$0xff]
        %v1166 = vld [vmem:[#allocation4 + $0xe0] sm:$0xff]
        %v1167 = vld [vmem:[#allocation4 + $0xe8] sm:$0xff]
        %v1168 = vld [vmem:[#allocation4 + $0xf0] sm:$0xff]
        %v1169 = vld [vmem:[#allocation4 + $0xf8] sm:$0xff]
        %v1170 = vld [vmem:[#allocation4 + $0x100] sm:$0xff]
        %v1171 = vld [vmem:[#allocation4 + $0x108] sm:$0xff]
        %v1172 = vld [vmem:[#allocation4 + $0x110] sm:$0xff]
        %v1173 = vld [vmem:[#allocation4 + $0x118] sm:$0xff]
        %v1174 = vld [vmem:[#allocation4 + $0x120] sm:$0xff]
        %v1175 = vld [vmem:[#allocation4 + $0x128] sm:$0xff]
        %v1176 = vld [vmem:[#allocation4 + $0x130] sm:$0xff]
        %v1177 = vld [vmem:[#allocation4 + $0x138] sm:$0xff]
        %v1178 = vld [vmem:[#allocation4 + $0x140] sm:$0xff]
        %v1179 = vld [vmem:[#allocation4 + $0x148] sm:$0xff]
        %v1180 = vld [vmem:[#allocation4 + $0x150] sm:$0xff]
        %v1181 = vld [vmem:[#allocation4 + $0x158] sm:$0xff]
        %v1182 = vld [vmem:[#allocation4 + $0x160] sm:$0xff]
        %v1183 = vld [vmem:[#allocation4 + $0x168] sm:$0xff]
        %v1184 = vld [vmem:[#allocation4 + $0x170] sm:$0xff]
        %v1185 = vld [vmem:[#allocation4 + $0x178] sm:$0xff]
        %v1186 = vld [vmem:[#allocation4 + $0x180] sm:$0xff]
        %v1187 = vld [vmem:[#allocation4 + $0x188] sm:$0xff]
        %v1188 = vld [vmem:[#allocation4 + $0x190] sm:$0xff]
        %v1189 = vld [vmem:[#allocation4 + $0x198] sm:$0xff]
        %v1190 = vld [vmem:[#allocation4 + $0x1a0] sm:$0xff]
        %v1191 = vld [vmem:[#allocation4 + $0x1a8] sm:$0xff]
        %v1192 = vld [vmem:[#allocation4 + $0x1b0] sm:$0xff]
        %v1193 = vld [vmem:[#allocation4 + $0x1b8] sm:$0xff]
        %v1194 = vld [vmem:[#allocation4 + $0x1c0] sm:$0xff]
        %v1195 = vld [vmem:[#allocation4 + $0x1c8] sm:$0xff]
        %v1196 = vld [vmem:[#allocation4 + $0x1d0] sm:$0xff]
        %v1197 = vld [vmem:[#allocation4 + $0x1d8] sm:$0xff]
        %v1198 = vld [vmem:[#allocation4 + $0x1e0] sm:$0xff]
        %v1199 = vld [vmem:[#allocation4 + $0x1e8] sm:$0xff]
        %v1200 = vld [vmem:[#allocation4 + $0x1f0] sm:$0xff]
        %v1201 = vld [vmem:[#allocation4 + $0x1f8] sm:$0xff]
        %1203 = vset.pattern.permute.xlu0 0
        %1204 = vperm.xlu0 %1203, %v882
        %v1205 = vpop.permute.xlu0 %1204
        %1208 = vset.pattern.permute.xlu0 0
        %1209 = vperm.xlu0 %1208, %v884
        %v1210 = vpop.permute.xlu0 %1209
        %1213 = vset.pattern.permute.xlu0 0
        %1214 = vperm.xlu0 %1213, %v886
        %v1215 = vpop.permute.xlu0 %1214
        %1218 = vset.pattern.permute.xlu0 0
        %1219 = vperm.xlu0 %1218, %v888
        %v1220 = vpop.permute.xlu0 %1219
        %1223 = vset.pattern.permute.xlu0 0
        %1224 = vperm.xlu0 %1223, %v890
        %v1225 = vpop.permute.xlu0 %1224
        %1228 = vset.pattern.permute.xlu0 0
        %1229 = vperm.xlu0 %1228, %v892
        %v1230 = vpop.permute.xlu0 %1229
        %1233 = vset.pattern.permute.xlu0 0
        %1234 = vperm.xlu0 %1233, %v894
        %v1235 = vpop.permute.xlu0 %1234
        %1238 = vset.pattern.permute.xlu0 0
        %1239 = vperm.xlu0 %1238, %v896
        %v1240 = vpop.permute.xlu0 %1239
        %1243 = vset.pattern.permute.xlu0 0
        %1244 = vperm.xlu0 %1243, %v898
        %v1245 = vpop.permute.xlu0 %1244
        %1248 = vset.pattern.permute.xlu0 0
        %1249 = vperm.xlu0 %1248, %v900
        %v1250 = vpop.permute.xlu0 %1249
        %1253 = vset.pattern.permute.xlu0 0
        %1254 = vperm.xlu0 %1253, %v902
        %v1255 = vpop.permute.xlu0 %1254
        %1258 = vset.pattern.permute.xlu0 0
        %1259 = vperm.xlu0 %1258, %v904
        %v1260 = vpop.permute.xlu0 %1259
        %1263 = vset.pattern.permute.xlu0 0
        %1264 = vperm.xlu0 %1263, %v906
        %v1265 = vpop.permute.xlu0 %1264
        %1268 = vset.pattern.permute.xlu0 0
        %1269 = vperm.xlu0 %1268, %v908
        %v1270 = vpop.permute.xlu0 %1269
        %1273 = vset.pattern.permute.xlu0 0
        %1274 = vperm.xlu0 %1273, %v910
        %v1275 = vpop.permute.xlu0 %1274
        %1278 = vset.pattern.permute.xlu0 0
        %1279 = vperm.xlu0 %1278, %v912
        %v1280 = vpop.permute.xlu0 %1279
        %v1282 = vmul.f32 %v1205, %v1138
        %v1283 = vmul.f32 %v1205, %v1139
        %v1284 = vmul.f32 %v1205, %v1140
        %v1285 = vmul.f32 %v1205, %v1141
        %v1286 = vmul.f32 %v1210, %v1142
        %v1287 = vmul.f32 %v1210, %v1143
        %v1288 = vmul.f32 %v1210, %v1144
        %v1289 = vmul.f32 %v1210, %v1145
        %v1290 = vmul.f32 %v1215, %v1146
        %v1291 = vmul.f32 %v1215, %v1147
        %v1292 = vmul.f32 %v1215, %v1148
        %v1293 = vmul.f32 %v1215, %v1149
        %v1294 = vmul.f32 %v1220, %v1150
        %v1295 = vmul.f32 %v1220, %v1151
        %v1296 = vmul.f32 %v1220, %v1152
        %v1297 = vmul.f32 %v1220, %v1153
        %v1298 = vmul.f32 %v1225, %v1154
        %v1299 = vmul.f32 %v1225, %v1155
        %v1300 = vmul.f32 %v1225, %v1156
        %v1301 = vmul.f32 %v1225, %v1157
        %v1302 = vmul.f32 %v1230, %v1158
        %v1303 = vmul.f32 %v1230, %v1159
        %v1304 = vmul.f32 %v1230, %v1160
        %v1305 = vmul.f32 %v1230, %v1161
        %v1306 = vmul.f32 %v1235, %v1162
        %v1307 = vmul.f32 %v1235, %v1163
        %v1308 = vmul.f32 %v1235, %v1164
        %v1309 = vmul.f32 %v1235, %v1165
        %v1310 = vmul.f32 %v1240, %v1166
        %v1311 = vmul.f32 %v1240, %v1167
        %v1312 = vmul.f32 %v1240, %v1168
        %v1313 = vmul.f32 %v1240, %v1169
        %v1314 = vmul.f32 %v1245, %v1170
        %v1315 = vmul.f32 %v1245, %v1171
        %v1316 = vmul.f32 %v1245, %v1172
        %v1317 = vmul.f32 %v1245, %v1173
        %v1318 = vmul.f32 %v1250, %v1174
        %v1319 = vmul.f32 %v1250, %v1175
        %v1320 = vmul.f32 %v1250, %v1176
        %v1321 = vmul.f32 %v1250, %v1177
        %v1322 = vmul.f32 %v1255, %v1178
        %v1323 = vmul.f32 %v1255, %v1179
        %v1324 = vmul.f32 %v1255, %v1180
        %v1325 = vmul.f32 %v1255, %v1181
        %v1326 = vmul.f32 %v1260, %v1182
        %v1327 = vmul.f32 %v1260, %v1183
        %v1328 = vmul.f32 %v1260, %v1184
        %v1329 = vmul.f32 %v1260, %v1185
        %v1330 = vmul.f32 %v1265, %v1186
        %v1331 = vmul.f32 %v1265, %v1187
        %v1332 = vmul.f32 %v1265, %v1188
        %v1333 = vmul.f32 %v1265, %v1189
        %v1334 = vmul.f32 %v1270, %v1190
        %v1335 = vmul.f32 %v1270, %v1191
        %v1336 = vmul.f32 %v1270, %v1192
        %v1337 = vmul.f32 %v1270, %v1193
        %v1338 = vmul.f32 %v1275, %v1194
        %v1339 = vmul.f32 %v1275, %v1195
        %v1340 = vmul.f32 %v1275, %v1196
        %v1341 = vmul.f32 %v1275, %v1197
        %v1342 = vmul.f32 %v1280, %v1198
        %v1343 = vmul.f32 %v1280, %v1199
        %v1344 = vmul.f32 %v1280, %v1200
        %v1345 = vmul.f32 %v1280, %v1201
        %v1346 = vld [vmem:[%s246] sm:$0xff]
        %v1347 = vld [vmem:[%s246 + $0x8] sm:$0xff]
        %v1348 = vld [vmem:[%s246 + $0x10] sm:$0xff]
        %v1349 = vld [vmem:[%s246 + $0x18] sm:$0xff]
        %v1350 = vld [vmem:[%s246 + $0x20] sm:$0xff]
        %v1351 = vld [vmem:[%s246 + $0x28] sm:$0xff]
        %v1352 = vld [vmem:[%s246 + $0x30] sm:$0xff]
        %v1353 = vld [vmem:[%s246 + $0x38] sm:$0xff]
        %v1354 = vld [vmem:[%s246 + $0x40] sm:$0xff]
        %v1355 = vld [vmem:[%s246 + $0x48] sm:$0xff]
        %v1356 = vld [vmem:[%s246 + $0x50] sm:$0xff]
        %v1357 = vld [vmem:[%s246 + $0x58] sm:$0xff]
        %v1358 = vld [vmem:[%s246 + $0x60] sm:$0xff]
        %v1359 = vld [vmem:[%s246 + $0x68] sm:$0xff]
        %v1360 = vld [vmem:[%s246 + $0x70] sm:$0xff]
        %v1361 = vld [vmem:[%s246 + $0x78] sm:$0xff]
        %v1362 = vld [vmem:[%s246 + $0x80] sm:$0xff]
        %v1363 = vld [vmem:[%s246 + $0x88] sm:$0xff]
        %v1364 = vld [vmem:[%s246 + $0x90] sm:$0xff]
        %v1365 = vld [vmem:[%s246 + $0x98] sm:$0xff]
        %v1366 = vld [vmem:[%s246 + $0xa0] sm:$0xff]
        %v1367 = vld [vmem:[%s246 + $0xa8] sm:$0xff]
        %v1368 = vld [vmem:[%s246 + $0xb0] sm:$0xff]
        %v1369 = vld [vmem:[%s246 + $0xb8] sm:$0xff]
        %v1370 = vld [vmem:[%s246 + $0xc0] sm:$0xff]
        %v1371 = vld [vmem:[%s246 + $0xc8] sm:$0xff]
        %v1372 = vld [vmem:[%s246 + $0xd0] sm:$0xff]
        %v1373 = vld [vmem:[%s246 + $0xd8] sm:$0xff]
        %v1374 = vld [vmem:[%s246 + $0xe0] sm:$0xff]
        %v1375 = vld [vmem:[%s246 + $0xe8] sm:$0xff]
        %v1376 = vld [vmem:[%s246 + $0xf0] sm:$0xff]
        %v1377 = vld [vmem:[%s246 + $0xf8] sm:$0xff]
        %v1378 = vld [vmem:[%s246 + $0x100] sm:$0xff]
        %v1379 = vld [vmem:[%s246 + $0x108] sm:$0xff]
        %v1380 = vld [vmem:[%s246 + $0x110] sm:$0xff]
        %v1381 = vld [vmem:[%s246 + $0x118] sm:$0xff]
        %v1382 = vld [vmem:[%s246 + $0x120] sm:$0xff]
        %v1383 = vld [vmem:[%s246 + $0x128] sm:$0xff]
        %v1384 = vld [vmem:[%s246 + $0x130] sm:$0xff]
        %v1385 = vld [vmem:[%s246 + $0x138] sm:$0xff]
        %v1386 = vld [vmem:[%s246 + $0x140] sm:$0xff]
        %v1387 = vld [vmem:[%s246 + $0x148] sm:$0xff]
        %v1388 = vld [vmem:[%s246 + $0x150] sm:$0xff]
        %v1389 = vld [vmem:[%s246 + $0x158] sm:$0xff]
        %v1390 = vld [vmem:[%s246 + $0x160] sm:$0xff]
        %v1391 = vld [vmem:[%s246 + $0x168] sm:$0xff]
        %v1392 = vld [vmem:[%s246 + $0x170] sm:$0xff]
        %v1393 = vld [vmem:[%s246 + $0x178] sm:$0xff]
        %v1394 = vld [vmem:[%s246 + $0x180] sm:$0xff]
        %v1395 = vld [vmem:[%s246 + $0x188] sm:$0xff]
        %v1396 = vld [vmem:[%s246 + $0x190] sm:$0xff]
        %v1397 = vld [vmem:[%s246 + $0x198] sm:$0xff]
        %v1398 = vld [vmem:[%s246 + $0x1a0] sm:$0xff]
        %v1399 = vld [vmem:[%s246 + $0x1a8] sm:$0xff]
        %v1400 = vld [vmem:[%s246 + $0x1b0] sm:$0xff]
        %v1401 = vld [vmem:[%s246 + $0x1b8] sm:$0xff]
        %v1402 = vld [vmem:[%s246 + $0x1c0] sm:$0xff]
        %v1403 = vld [vmem:[%s246 + $0x1c8] sm:$0xff]
        %v1404 = vld [vmem:[%s246 + $0x1d0] sm:$0xff]
        %v1405 = vld [vmem:[%s246 + $0x1d8] sm:$0xff]
        %v1406 = vld [vmem:[%s246 + $0x1e0] sm:$0xff]
        %v1407 = vld [vmem:[%s246 + $0x1e8] sm:$0xff]
        %v1408 = vld [vmem:[%s246 + $0x1f0] sm:$0xff]
        %v1409 = vld [vmem:[%s246 + $0x1f8] sm:$0xff]
        %1410 = vmatprep.subr.mxu0 %v1407
        %1411 = vmatpush1.msra.mxu0 %v1406
        %1412 = vmatprep.subr.mxu0 %v1403
        %1413 = vmatpush1.msra.mxu0 %v1402
        %1414 = vmatprep.subr.mxu0 %v1399
        %1415 = vmatpush1.msra.mxu0 %v1398
        %1416 = vmatprep.subr.mxu0 %v1395
        %1417 = vmatpush1.msra.mxu0 %v1394
        %1418 = vmatprep.subr.mxu0 %v1391
        %1419 = vmatpush1.msra.mxu0 %v1390
        %1420 = vmatprep.subr.mxu0 %v1387
        %1421 = vmatpush1.msra.mxu0 %v1386
        %1422 = vmatprep.subr.mxu0 %v1383
        %1423 = vmatpush1.msra.mxu0 %v1382
        %1424 = vmatprep.subr.mxu0 %v1379
        %1425 = vmatpush1.msra.mxu0 %v1378
        %1426 = vmatprep.subr.mxu0 %v1375
        %1427 = vmatpush1.msra.mxu0 %v1374
        %1428 = vmatprep.subr.mxu0 %v1371
        %1429 = vmatpush1.msra.mxu0 %v1370
        %1430 = vmatprep.subr.mxu0 %v1367
        %1431 = vmatpush1.msra.mxu0 %v1366
        %1432 = vmatprep.subr.mxu0 %v1363
        %1433 = vmatpush1.msra.mxu0 %v1362
        %1434 = vmatprep.subr.mxu0 %v1359
        %1435 = vmatpush1.msra.mxu0 %v1358
        %1436 = vmatprep.subr.mxu0 %v1355
        %1437 = vmatpush1.msra.mxu0 %v1354
        %1438 = vmatprep.subr.mxu0 %v1351
        %1439 = vmatpush1.msra.mxu0 %v1350
        %1440 = vmatprep.subr.mxu0 %v1347
        %1441 = vmatpush1.msra.mxu0 %v1346
        %1442 = vmatprep.subr.mxu0 0.0
        %1443 = vmatpush2.msra.mxu0 0.0
        %1444 = vmatprep.subr.mxu0 0.0
        %1445 = vmatpush2.msra.mxu0 0.0
        %1446 = vmatprep.subr.mxu0 0.0
        %1447 = vmatpush2.msra.mxu0 0.0
        %1448 = vmatprep.subr.mxu0 0.0
        %1449 = vmatpush2.msra.mxu0 0.0
        %1450 = vmatprep.subr.mxu0 0.0
        %1451 = vmatpush2.msra.mxu0 0.0
        %1452 = vmatprep.subr.mxu0 0.0
        %1453 = vmatpush2.msra.mxu0 0.0
        %1454 = vmatprep.subr.mxu0 0.0
        %1455 = vmatpush2.msra.mxu0 0.0
        %1456 = vmatprep.subr.mxu0 0.0
        %1457 = vmatpush2.msra.mxu0 0.0
        %1458 = vmatprep.subr.mxu0 0.0
        %1459 = vmatpush2.msra.mxu0 0.0
        %1460 = vmatprep.subr.mxu0 0.0
        %1461 = vmatpush2.msra.mxu0 0.0
        %1462 = vmatprep.subr.mxu0 0.0
        %1463 = vmatpush2.msra.mxu0 0.0
        %1464 = vmatprep.subr.mxu0 0.0
        %1465 = vmatpush2.msra.mxu0 0.0
        %1466 = vmatprep.subr.mxu0 0.0
        %1467 = vmatpush2.msra.mxu0 0.0
        %1468 = vmatprep.subr.mxu0 0.0
        %1469 = vmatpush2.msra.mxu0 0.0
        %1470 = vmatprep.subr.mxu0 0.0
        %1471 = vmatpush2.msra.mxu0 0.0
        %1472 = vmatprep.subr.mxu0 0.0
        %1473 = vmatpush2.msra.mxu0 0.0
        %1474 = vmatprep.mubr.f32.mxu0 0.0
        %1475 = vmatmul.mubr.f32.gmra.mxu0 %v1010
        %v1476 = vpop.f32.mrf.mxu0
        %v1477 = vadd.f32 0.0, %v1476
        %v1478 = vpop.f32.mrf.mxu0
        %v1479 = vadd.f32 0.0, %v1478
        %1480 = vmatprep.mubr.f32.mxu0 0.0
        %1481 = vmatmul.mubr.f32.gmra.mxu0 %v1012
        %v1482 = vpop.f32.mrf.mxu0
        %v1483 = vadd.f32 0.0, %v1482
        %v1484 = vpop.f32.mrf.mxu0
        %v1485 = vadd.f32 0.0, %v1484
        %1486 = vmatprep.mubr.f32.mxu0 0.0
        %1487 = vmatmul.mubr.f32.gmra.mxu0 %v1014
        %v1488 = vpop.f32.mrf.mxu0
        %v1489 = vadd.f32 0.0, %v1488
        %v1490 = vpop.f32.mrf.mxu0
        %v1491 = vadd.f32 0.0, %v1490
        %1492 = vmatprep.mubr.f32.mxu0 0.0
        %1493 = vmatmul.mubr.f32.gmra.mxu0 %v1016
        %v1494 = vpop.f32.mrf.mxu0
        %v1495 = vadd.f32 0.0, %v1494
        %v1496 = vpop.f32.mrf.mxu0
        %v1497 = vadd.f32 0.0, %v1496
        %1498 = vmatprep.mubr.f32.mxu0 0.0
        %1499 = vmatmul.mubr.f32.gmra.mxu0 %v1018
        %v1500 = vpop.f32.mrf.mxu0
        %v1501 = vadd.f32 0.0, %v1500
        %v1502 = vpop.f32.mrf.mxu0
        %v1503 = vadd.f32 0.0, %v1502
        %1504 = vmatprep.mubr.f32.mxu0 0.0
        %1505 = vmatmul.mubr.f32.gmra.mxu0 %v1020
        %v1506 = vpop.f32.mrf.mxu0
        %v1507 = vadd.f32 0.0, %v1506
        %v1508 = vpop.f32.mrf.mxu0
        %v1509 = vadd.f32 0.0, %v1508
        %1510 = vmatprep.mubr.f32.mxu0 0.0
        %1511 = vmatmul.mubr.f32.gmra.mxu0 %v1022
        %v1512 = vpop.f32.mrf.mxu0
        %v1513 = vadd.f32 0.0, %v1512
        %v1514 = vpop.f32.mrf.mxu0
        %v1515 = vadd.f32 0.0, %v1514
        %1516 = vmatprep.mubr.f32.mxu0 0.0
        %1517 = vmatmul.mubr.f32.gmra.mxu0 %v1024
        %v1518 = vpop.f32.mrf.mxu0
        %v1519 = vadd.f32 0.0, %v1518
        %v1520 = vpop.f32.mrf.mxu0
        %v1521 = vadd.f32 0.0, %v1520
        %1522 = vmatprep.mubr.f32.mxu0 0.0
        %1523 = vmatmul.mubr.f32.gmra.mxu0 %v1026
        %v1524 = vpop.f32.mrf.mxu0
        %v1525 = vadd.f32 0.0, %v1524
        %v1526 = vpop.f32.mrf.mxu0
        %v1527 = vadd.f32 0.0, %v1526
        %1528 = vmatprep.mubr.f32.mxu0 0.0
        %1529 = vmatmul.mubr.f32.gmra.mxu0 %v1028
        %v1530 = vpop.f32.mrf.mxu0
        %v1531 = vadd.f32 0.0, %v1530
        %v1532 = vpop.f32.mrf.mxu0
        %v1533 = vadd.f32 0.0, %v1532
        %1534 = vmatprep.mubr.f32.mxu0 0.0
        %1535 = vmatmul.mubr.f32.gmra.mxu0 %v1030
        %v1536 = vpop.f32.mrf.mxu0
        %v1537 = vadd.f32 0.0, %v1536
        %v1538 = vpop.f32.mrf.mxu0
        %v1539 = vadd.f32 0.0, %v1538
        %1540 = vmatprep.mubr.f32.mxu0 0.0
        %1541 = vmatmul.mubr.f32.gmra.mxu0 %v1032
        %v1542 = vpop.f32.mrf.mxu0
        %v1543 = vadd.f32 0.0, %v1542
        %v1544 = vpop.f32.mrf.mxu0
        %v1545 = vadd.f32 0.0, %v1544
        %1546 = vmatprep.mubr.f32.mxu0 0.0
        %1547 = vmatmul.mubr.f32.gmra.mxu0 %v1034
        %v1548 = vpop.f32.mrf.mxu0
        %v1549 = vadd.f32 0.0, %v1548
        %v1550 = vpop.f32.mrf.mxu0
        %v1551 = vadd.f32 0.0, %v1550
        %1552 = vmatprep.mubr.f32.mxu0 0.0
        %1553 = vmatmul.mubr.f32.gmra.mxu0 %v1036
        %v1554 = vpop.f32.mrf.mxu0
        %v1555 = vadd.f32 0.0, %v1554
        %v1556 = vpop.f32.mrf.mxu0
        %v1557 = vadd.f32 0.0, %v1556
        %1558 = vmatprep.mubr.f32.mxu0 0.0
        %1559 = vmatmul.mubr.f32.gmra.mxu0 %v1038
        %v1560 = vpop.f32.mrf.mxu0
        %v1561 = vadd.f32 0.0, %v1560
        %v1562 = vpop.f32.mrf.mxu0
        %v1563 = vadd.f32 0.0, %v1562
        %1564 = vmatprep.mubr.f32.mxu0 0.0
        %1565 = vmatmul.mubr.f32.gmra.mxu0 %v1040
        %v1566 = vpop.f32.mrf.mxu0
        %v1567 = vadd.f32 0.0, %v1566
        %v1568 = vpop.f32.mrf.mxu0
        %v1569 = vadd.f32 0.0, %v1568
        %1570 = vdwg.mxu0
        %1571 = vmatprep.subr.mxu0 %v1409
        %1572 = vmatpush1.msra.mxu0 %v1408
        %1573 = vmatprep.subr.mxu0 %v1405
        %1574 = vmatpush1.msra.mxu0 %v1404
        %1575 = vmatprep.subr.mxu0 %v1401
        %1576 = vmatpush1.msra.mxu0 %v1400
        %1577 = vmatprep.subr.mxu0 %v1397
        %1578 = vmatpush1.msra.mxu0 %v1396
        %1579 = vmatprep.subr.mxu0 %v1393
        %1580 = vmatpush1.msra.mxu0 %v1392
        %1581 = vmatprep.subr.mxu0 %v1389
        %1582 = vmatpush1.msra.mxu0 %v1388
        %1583 = vmatprep.subr.mxu0 %v1385
        %1584 = vmatpush1.msra.mxu0 %v1384
        %1585 = vmatprep.subr.mxu0 %v1381
        %1586 = vmatpush1.msra.mxu0 %v1380
        %1587 = vmatprep.subr.mxu0 %v1377
        %1588 = vmatpush1.msra.mxu0 %v1376
        %1589 = vmatprep.subr.mxu0 %v1373
        %1590 = vmatpush1.msra.mxu0 %v1372
        %1591 = vmatprep.subr.mxu0 %v1369
        %1592 = vmatpush1.msra.mxu0 %v1368
        %1593 = vmatprep.subr.mxu0 %v1365
        %1594 = vmatpush1.msra.mxu0 %v1364
        %1595 = vmatprep.subr.mxu0 %v1361
        %1596 = vmatpush1.msra.mxu0 %v1360
        %1597 = vmatprep.subr.mxu0 %v1357
        %1598 = vmatpush1.msra.mxu0 %v1356
        %1599 = vmatprep.subr.mxu0 %v1353
        %1600 = vmatpush1.msra.mxu0 %v1352
        %1601 = vmatprep.subr.mxu0 %v1349
        %1602 = vmatpush1.msra.mxu0 %v1348
        %1603 = vmatprep.subr.mxu0 0.0
        %1604 = vmatpush2.msra.mxu0 0.0
        %1605 = vmatprep.subr.mxu0 0.0
        %1606 = vmatpush2.msra.mxu0 0.0
        %1607 = vmatprep.subr.mxu0 0.0
        %1608 = vmatpush2.msra.mxu0 0.0
        %1609 = vmatprep.subr.mxu0 0.0
        %1610 = vmatpush2.msra.mxu0 0.0
        %1611 = vmatprep.subr.mxu0 0.0
        %1612 = vmatpush2.msra.mxu0 0.0
        %1613 = vmatprep.subr.mxu0 0.0
        %1614 = vmatpush2.msra.mxu0 0.0
        %1615 = vmatprep.subr.mxu0 0.0
        %1616 = vmatpush2.msra.mxu0 0.0
        %1617 = vmatprep.subr.mxu0 0.0
        %1618 = vmatpush2.msra.mxu0 0.0
        %1619 = vmatprep.subr.mxu0 0.0
        %1620 = vmatpush2.msra.mxu0 0.0
        %1621 = vmatprep.subr.mxu0 0.0
        %1622 = vmatpush2.msra.mxu0 0.0
        %1623 = vmatprep.subr.mxu0 0.0
        %1624 = vmatpush2.msra.mxu0 0.0
        %1625 = vmatprep.subr.mxu0 0.0
        %1626 = vmatpush2.msra.mxu0 0.0
        %1627 = vmatprep.subr.mxu0 0.0
        %1628 = vmatpush2.msra.mxu0 0.0
        %1629 = vmatprep.subr.mxu0 0.0
        %1630 = vmatpush2.msra.mxu0 0.0
        %1631 = vmatprep.subr.mxu0 0.0
        %1632 = vmatpush2.msra.mxu0 0.0
        %1633 = vmatprep.subr.mxu0 0.0
        %1634 = vmatpush2.msra.mxu0 0.0
        %1635 = vmatprep.mubr.f32.mxu0 0.0
        %1636 = vmatmul.mubr.f32.gmra.mxu0 %v1010
        %v1637 = vpop.f32.mrf.mxu0
        %v1638 = vadd.f32 0.0, %v1637
        %v1639 = vpop.f32.mrf.mxu0
        %v1640 = vadd.f32 0.0, %v1639
        %1641 = vmatprep.mubr.f32.mxu0 0.0
        %1642 = vmatmul.mubr.f32.gmra.mxu0 %v1012
        %v1643 = vpop.f32.mrf.mxu0
        %v1644 = vadd.f32 0.0, %v1643
        %v1645 = vpop.f32.mrf.mxu0
        %v1646 = vadd.f32 0.0, %v1645
        %1647 = vmatprep.mubr.f32.mxu0 0.0
        %1648 = vmatmul.mubr.f32.gmra.mxu0 %v1014
        %v1649 = vpop.f32.mrf.mxu0
        %v1650 = vadd.f32 0.0, %v1649
        %v1651 = vpop.f32.mrf.mxu0
        %v1652 = vadd.f32 0.0, %v1651
        %1653 = vmatprep.mubr.f32.mxu0 0.0
        %1654 = vmatmul.mubr.f32.gmra.mxu0 %v1016
        %v1655 = vpop.f32.mrf.mxu0
        %v1656 = vadd.f32 0.0, %v1655
        %v1657 = vpop.f32.mrf.mxu0
        %v1658 = vadd.f32 0.0, %v1657
        %1659 = vmatprep.mubr.f32.mxu0 0.0
        %1660 = vmatmul.mubr.f32.gmra.mxu0 %v1018
        %v1661 = vpop.f32.mrf.mxu0
        %v1662 = vadd.f32 0.0, %v1661
        %v1663 = vpop.f32.mrf.mxu0
        %v1664 = vadd.f32 0.0, %v1663
        %1665 = vmatprep.mubr.f32.mxu0 0.0
        %1666 = vmatmul.mubr.f32.gmra.mxu0 %v1020
        %v1667 = vpop.f32.mrf.mxu0
        %v1668 = vadd.f32 0.0, %v1667
        %v1669 = vpop.f32.mrf.mxu0
        %v1670 = vadd.f32 0.0, %v1669
        %1671 = vmatprep.mubr.f32.mxu0 0.0
        %1672 = vmatmul.mubr.f32.gmra.mxu0 %v1022
        %v1673 = vpop.f32.mrf.mxu0
        %v1674 = vadd.f32 0.0, %v1673
        %v1675 = vpop.f32.mrf.mxu0
        %v1676 = vadd.f32 0.0, %v1675
        %1677 = vmatprep.mubr.f32.mxu0 0.0
        %1678 = vmatmul.mubr.f32.gmra.mxu0 %v1024
        %v1679 = vpop.f32.mrf.mxu0
        %v1680 = vadd.f32 0.0, %v1679
        %v1681 = vpop.f32.mrf.mxu0
        %v1682 = vadd.f32 0.0, %v1681
        %1683 = vmatprep.mubr.f32.mxu0 0.0
        %1684 = vmatmul.mubr.f32.gmra.mxu0 %v1026
        %v1685 = vpop.f32.mrf.mxu0
        %v1686 = vadd.f32 0.0, %v1685
        %v1687 = vpop.f32.mrf.mxu0
        %v1688 = vadd.f32 0.0, %v1687
        %1689 = vmatprep.mubr.f32.mxu0 0.0
        %1690 = vmatmul.mubr.f32.gmra.mxu0 %v1028
        %v1691 = vpop.f32.mrf.mxu0
        %v1692 = vadd.f32 0.0, %v1691
        %v1693 = vpop.f32.mrf.mxu0
        %v1694 = vadd.f32 0.0, %v1693
        %1695 = vmatprep.mubr.f32.mxu0 0.0
        %1696 = vmatmul.mubr.f32.gmra.mxu0 %v1030
        %v1697 = vpop.f32.mrf.mxu0
        %v1698 = vadd.f32 0.0, %v1697
        %v1699 = vpop.f32.mrf.mxu0
        %v1700 = vadd.f32 0.0, %v1699
        %1701 = vmatprep.mubr.f32.mxu0 0.0
        %1702 = vmatmul.mubr.f32.gmra.mxu0 %v1032
        %v1703 = vpop.f32.mrf.mxu0
        %v1704 = vadd.f32 0.0, %v1703
        %v1705 = vpop.f32.mrf.mxu0
        %v1706 = vadd.f32 0.0, %v1705
        %1707 = vmatprep.mubr.f32.mxu0 0.0
        %1708 = vmatmul.mubr.f32.gmra.mxu0 %v1034
        %v1709 = vpop.f32.mrf.mxu0
        %v1710 = vadd.f32 0.0, %v1709
        %v1711 = vpop.f32.mrf.mxu0
        %v1712 = vadd.f32 0.0, %v1711
        %1713 = vmatprep.mubr.f32.mxu0 0.0
        %1714 = vmatmul.mubr.f32.gmra.mxu0 %v1036
        %v1715 = vpop.f32.mrf.mxu0
        %v1716 = vadd.f32 0.0, %v1715
        %v1717 = vpop.f32.mrf.mxu0
        %v1718 = vadd.f32 0.0, %v1717
        %1719 = vmatprep.mubr.f32.mxu0 0.0
        %1720 = vmatmul.mubr.f32.gmra.mxu0 %v1038
        %v1721 = vpop.f32.mrf.mxu0
        %v1722 = vadd.f32 0.0, %v1721
        %v1723 = vpop.f32.mrf.mxu0
        %v1724 = vadd.f32 0.0, %v1723
        %1725 = vmatprep.mubr.f32.mxu0 0.0
        %1726 = vmatmul.mubr.f32.gmra.mxu0 %v1040
        %v1727 = vpop.f32.mrf.mxu0
        %v1728 = vadd.f32 0.0, %v1727
        %v1729 = vpop.f32.mrf.mxu0
        %v1730 = vadd.f32 0.0, %v1729
        %1731 = vdwg.mxu0
        %v1732 = vadd.f32 %v1282, %v1477
        %v1733 = vadd.f32 %v1283, %v1479
        %v1734 = vadd.f32 %v1284, %v1638
        %v1735 = vadd.f32 %v1285, %v1640
        %v1736 = vadd.f32 %v1286, %v1483
        %v1737 = vadd.f32 %v1287, %v1485
        %v1738 = vadd.f32 %v1288, %v1644
        %v1739 = vadd.f32 %v1289, %v1646
        %v1740 = vadd.f32 %v1290, %v1489
        %v1741 = vadd.f32 %v1291, %v1491
        %v1742 = vadd.f32 %v1292, %v1650
        %v1743 = vadd.f32 %v1293, %v1652
        %v1744 = vadd.f32 %v1294, %v1495
        %v1745 = vadd.f32 %v1295, %v1497
        %v1746 = vadd.f32 %v1296, %v1656
        %v1747 = vadd.f32 %v1297, %v1658
        %v1748 = vadd.f32 %v1298, %v1501
        %v1749 = vadd.f32 %v1299, %v1503
        %v1750 = vadd.f32 %v1300, %v1662
        %v1751 = vadd.f32 %v1301, %v1664
        %v1752 = vadd.f32 %v1302, %v1507
        %v1753 = vadd.f32 %v1303, %v1509
        %v1754 = vadd.f32 %v1304, %v1668
        %v1755 = vadd.f32 %v1305, %v1670
        %v1756 = vadd.f32 %v1306, %v1513
        %v1757 = vadd.f32 %v1307, %v1515
        %v1758 = vadd.f32 %v1308, %v1674
        %v1759 = vadd.f32 %v1309, %v1676
        %v1760 = vadd.f32 %v1310, %v1519
        %v1761 = vadd.f32 %v1311, %v1521
        %v1762 = vadd.f32 %v1312, %v1680
        %v1763 = vadd.f32 %v1313, %v1682
        %v1764 = vadd.f32 %v1314, %v1525
        %v1765 = vadd.f32 %v1315, %v1527
        %v1766 = vadd.f32 %v1316, %v1686
        %v1767 = vadd.f32 %v1317, %v1688
        %v1768 = vadd.f32 %v1318, %v1531
        %v1769 = vadd.f32 %v1319, %v1533
        %v1770 = vadd.f32 %v1320, %v1692
        %v1771 = vadd.f32 %v1321, %v1694
        %v1772 = vadd.f32 %v1322, %v1537
        %v1773 = vadd.f32 %v1323, %v1539
        %v1774 = vadd.f32 %v1324, %v1698
        %v1775 = vadd.f32 %v1325, %v1700
        %v1776 = vadd.f32 %v1326, %v1543
        %v1777 = vadd.f32 %v1327, %v1545
        %v1778 = vadd.f32 %v1328, %v1704
        %v1779 = vadd.f32 %v1329, %v1706
        %v1780 = vadd.f32 %v1330, %v1549
        %v1781 = vadd.f32 %v1331, %v1551
        %v1782 = vadd.f32 %v1332, %v1710
        %v1783 = vadd.f32 %v1333, %v1712
        %v1784 = vadd.f32 %v1334, %v1555
        %v1785 = vadd.f32 %v1335, %v1557
        %v1786 = vadd.f32 %v1336, %v1716
        %v1787 = vadd.f32 %v1337, %v1718
        %v1788 = vadd.f32 %v1338, %v1561
        %v1789 = vadd.f32 %v1339, %v1563
        %v1790 = vadd.f32 %v1340, %v1722
        %v1791 = vadd.f32 %v1341, %v1724
        %v1792 = vadd.f32 %v1342, %v1567
        %v1793 = vadd.f32 %v1343, %v1569
        %v1794 = vadd.f32 %v1344, %v1728
        %v1795 = vadd.f32 %v1345, %v1730
        %1796 = vst [vmem:[#allocation4] sm:$0xff] %v1732
        %1797 = vst [vmem:[#allocation4 + $0x8] sm:$0xff] %v1733
        %1798 = vst [vmem:[#allocation4 + $0x10] sm:$0xff] %v1734
        %1799 = vst [vmem:[#allocation4 + $0x18] sm:$0xff] %v1735
        %1800 = vst [vmem:[#allocation4 + $0x20] sm:$0xff] %v1736
        %1801 = vst [vmem:[#allocation4 + $0x28] sm:$0xff] %v1737
        %1802 = vst [vmem:[#allocation4 + $0x30] sm:$0xff] %v1738
        %1803 = vst [vmem:[#allocation4 + $0x38] sm:$0xff] %v1739
        %1804 = vst [vmem:[#allocation4 + $0x40] sm:$0xff] %v1740
        %1805 = vst [vmem:[#allocation4 + $0x48] sm:$0xff] %v1741
        %1806 = vst [vmem:[#allocation4 + $0x50] sm:$0xff] %v1742
        %1807 = vst [vmem:[#allocation4 + $0x58] sm:$0xff] %v1743
        %1808 = vst [vmem:[#allocation4 + $0x60] sm:$0xff] %v1744
        %1809 = vst [vmem:[#allocation4 + $0x68] sm:$0xff] %v1745
        %1810 = vst [vmem:[#allocation4 + $0x70] sm:$0xff] %v1746
        %1811 = vst [vmem:[#allocation4 + $0x78] sm:$0xff] %v1747
        %1812 = vst [vmem:[#allocation4 + $0x80] sm:$0xff] %v1748
        %1813 = vst [vmem:[#allocation4 + $0x88] sm:$0xff] %v1749
        %1814 = vst [vmem:[#allocation4 + $0x90] sm:$0xff] %v1750
        %1815 = vst [vmem:[#allocation4 + $0x98] sm:$0xff] %v1751
        %1816 = vst [vmem:[#allocation4 + $0xa0] sm:$0xff] %v1752
        %1817 = vst [vmem:[#allocation4 + $0xa8] sm:$0xff] %v1753
        %1818 = vst [vmem:[#allocation4 + $0xb0] sm:$0xff] %v1754
        %1819 = vst [vmem:[#allocation4 + $0xb8] sm:$0xff] %v1755
        %1820 = vst [vmem:[#allocation4 + $0xc0] sm:$0xff] %v1756
        %1821 = vst [vmem:[#allocation4 + $0xc8] sm:$0xff] %v1757
        %1822 = vst [vmem:[#allocation4 + $0xd0] sm:$0xff] %v1758
        %1823 = vst [vmem:[#allocation4 + $0xd8] sm:$0xff] %v1759
        %1824 = vst [vmem:[#allocation4 + $0xe0] sm:$0xff] %v1760
        %1825 = vst [vmem:[#allocation4 + $0xe8] sm:$0xff] %v1761
        %1826 = vst [vmem:[#allocation4 + $0xf0] sm:$0xff] %v1762
        %1827 = vst [vmem:[#allocation4 + $0xf8] sm:$0xff] %v1763
        %1828 = vst [vmem:[#allocation4 + $0x100] sm:$0xff] %v1764
        %1829 = vst [vmem:[#allocation4 + $0x108] sm:$0xff] %v1765
        %1830 = vst [vmem:[#allocation4 + $0x110] sm:$0xff] %v1766
        %1831 = vst [vmem:[#allocation4 + $0x118] sm:$0xff] %v1767
        %1832 = vst [vmem:[#allocation4 + $0x120] sm:$0xff] %v1768
        %1833 = vst [vmem:[#allocation4 + $0x128] sm:$0xff] %v1769
        %1834 = vst [vmem:[#allocation4 + $0x130] sm:$0xff] %v1770
        %1835 = vst [vmem:[#allocation4 + $0x138] sm:$0xff] %v1771
        %1836 = vst [vmem:[#allocation4 + $0x140] sm:$0xff] %v1772
        %1837 = vst [vmem:[#allocation4 + $0x148] sm:$0xff] %v1773
        %1838 = vst [vmem:[#allocation4 + $0x150] sm:$0xff] %v1774
        %1839 = vst [vmem:[#allocation4 + $0x158] sm:$0xff] %v1775
        %1840 = vst [vmem:[#allocation4 + $0x160] sm:$0xff] %v1776
        %1841 = vst [vmem:[#allocation4 + $0x168] sm:$0xff] %v1777
        %1842 = vst [vmem:[#allocation4 + $0x170] sm:$0xff] %v1778
        %1843 = vst [vmem:[#allocation4 + $0x178] sm:$0xff] %v1779
        %1844 = vst [vmem:[#allocation4 + $0x180] sm:$0xff] %v1780
        %1845 = vst [vmem:[#allocation4 + $0x188] sm:$0xff] %v1781
        %1846 = vst [vmem:[#allocation4 + $0x190] sm:$0xff] %v1782
        %1847 = vst [vmem:[#allocation4 + $0x198] sm:$0xff] %v1783
        %1848 = vst [vmem:[#allocation4 + $0x1a0] sm:$0xff] %v1784
        %1849 = vst [vmem:[#allocation4 + $0x1a8] sm:$0xff] %v1785
        %1850 = vst [vmem:[#allocation4 + $0x1b0] sm:$0xff] %v1786
        %1851 = vst [vmem:[#allocation4 + $0x1b8] sm:$0xff] %v1787
        %1852 = vst [vmem:[#allocation4 + $0x1c0] sm:$0xff] %v1788
        %1853 = vst [vmem:[#allocation4 + $0x1c8] sm:$0xff] %v1789
        %1854 = vst [vmem:[#allocation4 + $0x1d0] sm:$0xff] %v1790
        %1855 = vst [vmem:[#allocation4 + $0x1d8] sm:$0xff] %v1791
        %1856 = vst [vmem:[#allocation4 + $0x1e0] sm:$0xff] %v1792
        %1857 = vst [vmem:[#allocation4 + $0x1e8] sm:$0xff] %v1793
        %1858 = vst [vmem:[#allocation4 + $0x1f0] sm:$0xff] %v1794
        %1859 = vst [vmem:[#allocation4 + $0x1f8] sm:$0xff] %v1795
        %1860 = vst.msk [vmem:[#allocation2] sm:$0xff] %vm1121, %v849
        %1861 = vst.msk [vmem:[#allocation2 + $0x8] sm:$0xff] %vm1121, %v850
        %1862 = vst.msk [vmem:[#allocation2 + $0x10] sm:$0xff] %vm1121, %v851
        %1863 = vst.msk [vmem:[#allocation2 + $0x18] sm:$0xff] %vm1121, %v852
        %1864 = vst.msk [vmem:[#allocation2 + $0x20] sm:$0xff] %vm1121, %v853
        %1865 = vst.msk [vmem:[#allocation2 + $0x28] sm:$0xff] %vm1121, %v854
        %1866 = vst.msk [vmem:[#allocation2 + $0x30] sm:$0xff] %vm1121, %v855
        %1867 = vst.msk [vmem:[#allocation2 + $0x38] sm:$0xff] %vm1121, %v856
        %1868 = vst.msk [vmem:[#allocation2 + $0x40] sm:$0xff] %vm1121, %v857
        %1869 = vst.msk [vmem:[#allocation2 + $0x48] sm:$0xff] %vm1121, %v858
        %1870 = vst.msk [vmem:[#allocation2 + $0x50] sm:$0xff] %vm1121, %v859
        %1871 = vst.msk [vmem:[#allocation2 + $0x58] sm:$0xff] %vm1121, %v860
        %1872 = vst.msk [vmem:[#allocation2 + $0x60] sm:$0xff] %vm1121, %v861
        %1873 = vst.msk [vmem:[#allocation2 + $0x68] sm:$0xff] %vm1121, %v862
        %1874 = vst.msk [vmem:[#allocation2 + $0x70] sm:$0xff] %vm1121, %v863
        %1875 = vst.msk [vmem:[#allocation2 + $0x78] sm:$0xff] %vm1121, %v864
        %p1876 = scmp.eq.s32.totalorder %s28, 1
        // Predicated region
        $region49: #{tpu_custom_call.1} parent=31 // pred_check
          %p1877 = pneg %p1876
        $region50: #{tpu_custom_call.1} parent=31 // pred_check_branch
          %1879 = sbr.rel (%p1877) target = $region52
        $region51: #{tpu_custom_call.1} parent=31 // pred_region
          %v1880 = vld [vmem:[#allocation4] sm:$0xff]
          %v1881 = vld [vmem:[#allocation4 + $0x8] sm:$0xff]
          %v1882 = vld [vmem:[#allocation4 + $0x10] sm:$0xff]
          %v1883 = vld [vmem:[#allocation4 + $0x18] sm:$0xff]
          %v1884 = vld [vmem:[#allocation4 + $0x20] sm:$0xff]
          %v1885 = vld [vmem:[#allocation4 + $0x28] sm:$0xff]
          %v1886 = vld [vmem:[#allocation4 + $0x30] sm:$0xff]
          %v1887 = vld [vmem:[#allocation4 + $0x38] sm:$0xff]
          %v1888 = vld [vmem:[#allocation4 + $0x40] sm:$0xff]
          %v1889 = vld [vmem:[#allocation4 + $0x48] sm:$0xff]
          %v1890 = vld [vmem:[#allocation4 + $0x50] sm:$0xff]
          %v1891 = vld [vmem:[#allocation4 + $0x58] sm:$0xff]
          %v1892 = vld [vmem:[#allocation4 + $0x60] sm:$0xff]
          %v1893 = vld [vmem:[#allocation4 + $0x68] sm:$0xff]
          %v1894 = vld [vmem:[#allocation4 + $0x70] sm:$0xff]
          %v1895 = vld [vmem:[#allocation4 + $0x78] sm:$0xff]
          %v1896 = vld [vmem:[#allocation4 + $0x80] sm:$0xff]
          %v1897 = vld [vmem:[#allocation4 + $0x88] sm:$0xff]
          %v1898 = vld [vmem:[#allocation4 + $0x90] sm:$0xff]
          %v1899 = vld [vmem:[#allocation4 + $0x98] sm:$0xff]
          %v1900 = vld [vmem:[#allocation4 + $0xa0] sm:$0xff]
          %v1901 = vld [vmem:[#allocation4 + $0xa8] sm:$0xff]
          %v1902 = vld [vmem:[#allocation4 + $0xb0] sm:$0xff]
          %v1903 = vld [vmem:[#allocation4 + $0xb8] sm:$0xff]
          %v1904 = vld [vmem:[#allocation4 + $0xc0] sm:$0xff]
          %v1905 = vld [vmem:[#allocation4 + $0xc8] sm:$0xff]
          %v1906 = vld [vmem:[#allocation4 + $0xd0] sm:$0xff]
          %v1907 = vld [vmem:[#allocation4 + $0xd8] sm:$0xff]
          %v1908 = vld [vmem:[#allocation4 + $0xe0] sm:$0xff]
          %v1909 = vld [vmem:[#allocation4 + $0xe8] sm:$0xff]
          %v1910 = vld [vmem:[#allocation4 + $0xf0] sm:$0xff]
          %v1911 = vld [vmem:[#allocation4 + $0xf8] sm:$0xff]
          %v1912 = vld [vmem:[#allocation4 + $0x100] sm:$0xff]
          %v1913 = vld [vmem:[#allocation4 + $0x108] sm:$0xff]
          %v1914 = vld [vmem:[#allocation4 + $0x110] sm:$0xff]
          %v1915 = vld [vmem:[#allocation4 + $0x118] sm:$0xff]
          %v1916 = vld [vmem:[#allocation4 + $0x120] sm:$0xff]
          %v1917 = vld [vmem:[#allocation4 + $0x128] sm:$0xff]
          %v1918 = vld [vmem:[#allocation4 + $0x130] sm:$0xff]
          %v1919 = vld [vmem:[#allocation4 + $0x138] sm:$0xff]
          %v1920 = vld [vmem:[#allocation4 + $0x140] sm:$0xff]
          %v1921 = vld [vmem:[#allocation4 + $0x148] sm:$0xff]
          %v1922 = vld [vmem:[#allocation4 + $0x150] sm:$0xff]
          %v1923 = vld [vmem:[#allocation4 + $0x158] sm:$0xff]
          %v1924 = vld [vmem:[#allocation4 + $0x160] sm:$0xff]
          %v1925 = vld [vmem:[#allocation4 + $0x168] sm:$0xff]
          %v1926 = vld [vmem:[#allocation4 + $0x170] sm:$0xff]
          %v1927 = vld [vmem:[#allocation4 + $0x178] sm:$0xff]
          %v1928 = vld [vmem:[#allocation4 + $0x180] sm:$0xff]
          %v1929 = vld [vmem:[#allocation4 + $0x188] sm:$0xff]
          %v1930 = vld [vmem:[#allocation4 + $0x190] sm:$0xff]
          %v1931 = vld [vmem:[#allocation4 + $0x198] sm:$0xff]
          %v1932 = vld [vmem:[#allocation4 + $0x1a0] sm:$0xff]
          %v1933 = vld [vmem:[#allocation4 + $0x1a8] sm:$0xff]
          %v1934 = vld [vmem:[#allocation4 + $0x1b0] sm:$0xff]
          %v1935 = vld [vmem:[#allocation4 + $0x1b8] sm:$0xff]
          %v1936 = vld [vmem:[#allocation4 + $0x1c0] sm:$0xff]
          %v1937 = vld [vmem:[#allocation4 + $0x1c8] sm:$0xff]
          %v1938 = vld [vmem:[#allocation4 + $0x1d0] sm:$0xff]
          %v1939 = vld [vmem:[#allocation4 + $0x1d8] sm:$0xff]
          %v1940 = vld [vmem:[#allocation4 + $0x1e0] sm:$0xff]
          %v1941 = vld [vmem:[#allocation4 + $0x1e8] sm:$0xff]
          %v1942 = vld [vmem:[#allocation4 + $0x1f0] sm:$0xff]
          %v1943 = vld [vmem:[#allocation4 + $0x1f8] sm:$0xff]
          %v1944 = vld [vmem:[#allocation3] sm:$0xff]
          %v1945 = vld [vmem:[#allocation3 + $0x8] sm:$0xff]
          %v1946 = vld [vmem:[#allocation3 + $0x10] sm:$0xff]
          %v1947 = vld [vmem:[#allocation3 + $0x18] sm:$0xff]
          %v1948 = vld [vmem:[#allocation3 + $0x20] sm:$0xff]
          %v1949 = vld [vmem:[#allocation3 + $0x28] sm:$0xff]
          %v1950 = vld [vmem:[#allocation3 + $0x30] sm:$0xff]
          %v1951 = vld [vmem:[#allocation3 + $0x38] sm:$0xff]
          %v1952 = vld [vmem:[#allocation3 + $0x40] sm:$0xff]
          %v1953 = vld [vmem:[#allocation3 + $0x48] sm:$0xff]
          %v1954 = vld [vmem:[#allocation3 + $0x50] sm:$0xff]
          %v1955 = vld [vmem:[#allocation3 + $0x58] sm:$0xff]
          %v1956 = vld [vmem:[#allocation3 + $0x60] sm:$0xff]
          %v1957 = vld [vmem:[#allocation3 + $0x68] sm:$0xff]
          %v1958 = vld [vmem:[#allocation3 + $0x70] sm:$0xff]
          %v1959 = vld [vmem:[#allocation3 + $0x78] sm:$0xff]
          %v1960 = vrcp.pop %v1944
          %v1961 = vrcp.pop %v1945
          %v1962 = vrcp.pop %v1946
          %v1963 = vrcp.pop %v1947
          %v1964 = vrcp.pop %v1948
          %v1965 = vrcp.pop %v1949
          %v1966 = vrcp.pop %v1950
          %v1967 = vrcp.pop %v1951
          %v1968 = vrcp.pop %v1952
          %v1969 = vrcp.pop %v1953
          %v1970 = vrcp.pop %v1954
          %v1971 = vrcp.pop %v1955
          %v1972 = vrcp.pop %v1956
          %v1973 = vrcp.pop %v1957
          %v1974 = vrcp.pop %v1958
          %v1975 = vrcp.pop %v1959
          %1977 = vset.pattern.permute.xlu0 0
          %1978 = vperm.xlu0 %1977, %v1960
          %v1979 = vpop.permute.xlu0 %1978
          %1982 = vset.pattern.permute.xlu0 0
          %1983 = vperm.xlu0 %1982, %v1961
          %v1984 = vpop.permute.xlu0 %1983
          %1987 = vset.pattern.permute.xlu0 0
          %1988 = vperm.xlu0 %1987, %v1962
          %v1989 = vpop.permute.xlu0 %1988
          %1992 = vset.pattern.permute.xlu0 0
          %1993 = vperm.xlu0 %1992, %v1963
          %v1994 = vpop.permute.xlu0 %1993
          %1997 = vset.pattern.permute.xlu0 0
          %1998 = vperm.xlu0 %1997, %v1964
          %v1999 = vpop.permute.xlu0 %1998
          %2002 = vset.pattern.permute.xlu0 0
          %2003 = vperm.xlu0 %2002, %v1965
          %v2004 = vpop.permute.xlu0 %2003
          %2007 = vset.pattern.permute.xlu0 0
          %2008 = vperm.xlu0 %2007, %v1966
          %v2009 = vpop.permute.xlu0 %2008
          %2012 = vset.pattern.permute.xlu0 0
          %2013 = vperm.xlu0 %2012, %v1967
          %v2014 = vpop.permute.xlu0 %2013
          %2017 = vset.pattern.permute.xlu0 0
          %2018 = vperm.xlu0 %2017, %v1968
          %v2019 = vpop.permute.xlu0 %2018
          %2022 = vset.pattern.permute.xlu0 0
          %2023 = vperm.xlu0 %2022, %v1969
          %v2024 = vpop.permute.xlu0 %2023
          %2027 = vset.pattern.permute.xlu0 0
          %2028 = vperm.xlu0 %2027, %v1970
          %v2029 = vpop.permute.xlu0 %2028
          %2032 = vset.pattern.permute.xlu0 0
          %2033 = vperm.xlu0 %2032, %v1971
          %v2034 = vpop.permute.xlu0 %2033
          %2037 = vset.pattern.permute.xlu0 0
          %2038 = vperm.xlu0 %2037, %v1972
          %v2039 = vpop.permute.xlu0 %2038
          %2042 = vset.pattern.permute.xlu0 0
          %2043 = vperm.xlu0 %2042, %v1973
          %v2044 = vpop.permute.xlu0 %2043
          %2047 = vset.pattern.permute.xlu0 0
          %2048 = vperm.xlu0 %2047, %v1974
          %v2049 = vpop.permute.xlu0 %2048
          %2052 = vset.pattern.permute.xlu0 0
          %2053 = vperm.xlu0 %2052, %v1975
          %v2054 = vpop.permute.xlu0 %2053
          %v2056 = vmul.f32 %v1880, %v1979
          %v2057 = vmul.f32 %v1881, %v1979
          %v2058 = vmul.f32 %v1882, %v1979
          %v2059 = vmul.f32 %v1883, %v1979
          %v2060 = vmul.f32 %v1884, %v1984
          %v2061 = vmul.f32 %v1885, %v1984
          %v2062 = vmul.f32 %v1886, %v1984
          %v2063 = vmul.f32 %v1887, %v1984
          %v2064 = vmul.f32 %v1888, %v1989
          %v2065 = vmul.f32 %v1889, %v1989
          %v2066 = vmul.f32 %v1890, %v1989
          %v2067 = vmul.f32 %v1891, %v1989
          %v2068 = vmul.f32 %v1892, %v1994
          %v2069 = vmul.f32 %v1893, %v1994
          %v2070 = vmul.f32 %v1894, %v1994
          %v2071 = vmul.f32 %v1895, %v1994
          %v2072 = vmul.f32 %v1896, %v1999
          %v2073 = vmul.f32 %v1897, %v1999
          %v2074 = vmul.f32 %v1898, %v1999
          %v2075 = vmul.f32 %v1899, %v1999
          %v2076 = vmul.f32 %v1900, %v2004
          %v2077 = vmul.f32 %v1901, %v2004
          %v2078 = vmul.f32 %v1902, %v2004
          %v2079 = vmul.f32 %v1903, %v2004
          %v2080 = vmul.f32 %v1904, %v2009
          %v2081 = vmul.f32 %v1905, %v2009
          %v2082 = vmul.f32 %v1906, %v2009
          %v2083 = vmul.f32 %v1907, %v2009
          %v2084 = vmul.f32 %v1908, %v2014
          %v2085 = vmul.f32 %v1909, %v2014
          %v2086 = vmul.f32 %v1910, %v2014
          %v2087 = vmul.f32 %v1911, %v2014
          %v2088 = vmul.f32 %v1912, %v2019
          %v2089 = vmul.f32 %v1913, %v2019
          %v2090 = vmul.f32 %v1914, %v2019
          %v2091 = vmul.f32 %v1915, %v2019
          %v2092 = vmul.f32 %v1916, %v2024
          %v2093 = vmul.f32 %v1917, %v2024
          %v2094 = vmul.f32 %v1918, %v2024
          %v2095 = vmul.f32 %v1919, %v2024
          %v2096 = vmul.f32 %v1920, %v2029
          %v2097 = vmul.f32 %v1921, %v2029
          %v2098 = vmul.f32 %v1922, %v2029
          %v2099 = vmul.f32 %v1923, %v2029
          %v2100 = vmul.f32 %v1924, %v2034
          %v2101 = vmul.f32 %v1925, %v2034
          %v2102 = vmul.f32 %v1926, %v2034
          %v2103 = vmul.f32 %v1927, %v2034
          %v2104 = vmul.f32 %v1928, %v2039
          %v2105 = vmul.f32 %v1929, %v2039
          %v2106 = vmul.f32 %v1930, %v2039
          %v2107 = vmul.f32 %v1931, %v2039
          %v2108 = vmul.f32 %v1932, %v2044
          %v2109 = vmul.f32 %v1933, %v2044
          %v2110 = vmul.f32 %v1934, %v2044
          %v2111 = vmul.f32 %v1935, %v2044
          %v2112 = vmul.f32 %v1936, %v2049
          %v2113 = vmul.f32 %v1937, %v2049
          %v2114 = vmul.f32 %v1938, %v2049
          %v2115 = vmul.f32 %v1939, %v2049
          %v2116 = vmul.f32 %v1940, %v2054
          %v2117 = vmul.f32 %v1941, %v2054
          %v2118 = vmul.f32 %v1942, %v2054
          %v2119 = vmul.f32 %v1943, %v2054
          %2120 = vst [vmem:[%s278] sm:$0xff] %v2056
          %2121 = vst [vmem:[%s278 + $0x8] sm:$0xff] %v2057
          %2122 = vst [vmem:[%s278 + $0x10] sm:$0xff] %v2058
          %2123 = vst [vmem:[%s278 + $0x18] sm:$0xff] %v2059
          %2124 = vst [vmem:[%s278 + $0x20] sm:$0xff] %v2060
          %2125 = vst [vmem:[%s278 + $0x28] sm:$0xff] %v2061
          %2126 = vst [vmem:[%s278 + $0x30] sm:$0xff] %v2062
          %2127 = vst [vmem:[%s278 + $0x38] sm:$0xff] %v2063
          %2128 = vst [vmem:[%s278 + $0x40] sm:$0xff] %v2064
          %2129 = vst [vmem:[%s278 + $0x48] sm:$0xff] %v2065
          %2130 = vst [vmem:[%s278 + $0x50] sm:$0xff] %v2066
          %2131 = vst [vmem:[%s278 + $0x58] sm:$0xff] %v2067
          %2132 = vst [vmem:[%s278 + $0x60] sm:$0xff] %v2068
          %2133 = vst [vmem:[%s278 + $0x68] sm:$0xff] %v2069
          %2134 = vst [vmem:[%s278 + $0x70] sm:$0xff] %v2070
          %2135 = vst [vmem:[%s278 + $0x78] sm:$0xff] %v2071
          %2136 = vst [vmem:[%s278 + $0x80] sm:$0xff] %v2072
          %2137 = vst [vmem:[%s278 + $0x88] sm:$0xff] %v2073
          %2138 = vst [vmem:[%s278 + $0x90] sm:$0xff] %v2074
          %2139 = vst [vmem:[%s278 + $0x98] sm:$0xff] %v2075
          %2140 = vst [vmem:[%s278 + $0xa0] sm:$0xff] %v2076
          %2141 = vst [vmem:[%s278 + $0xa8] sm:$0xff] %v2077
          %2142 = vst [vmem:[%s278 + $0xb0] sm:$0xff] %v2078
          %2143 = vst [vmem:[%s278 + $0xb8] sm:$0xff] %v2079
          %2144 = vst [vmem:[%s278 + $0xc0] sm:$0xff] %v2080
          %2145 = vst [vmem:[%s278 + $0xc8] sm:$0xff] %v2081
          %2146 = vst [vmem:[%s278 + $0xd0] sm:$0xff] %v2082
          %2147 = vst [vmem:[%s278 + $0xd8] sm:$0xff] %v2083
          %2148 = vst [vmem:[%s278 + $0xe0] sm:$0xff] %v2084
          %2149 = vst [vmem:[%s278 + $0xe8] sm:$0xff] %v2085
          %2150 = vst [vmem:[%s278 + $0xf0] sm:$0xff] %v2086
          %2151 = vst [vmem:[%s278 + $0xf8] sm:$0xff] %v2087
          %2152 = vst [vmem:[%s278 + $0x100] sm:$0xff] %v2088
          %2153 = vst [vmem:[%s278 + $0x108] sm:$0xff] %v2089
          %2154 = vst [vmem:[%s278 + $0x110] sm:$0xff] %v2090
          %2155 = vst [vmem:[%s278 + $0x118] sm:$0xff] %v2091
          %2156 = vst [vmem:[%s278 + $0x120] sm:$0xff] %v2092
          %2157 = vst [vmem:[%s278 + $0x128] sm:$0xff] %v2093
          %2158 = vst [vmem:[%s278 + $0x130] sm:$0xff] %v2094
          %2159 = vst [vmem:[%s278 + $0x138] sm:$0xff] %v2095
          %2160 = vst [vmem:[%s278 + $0x140] sm:$0xff] %v2096
          %2161 = vst [vmem:[%s278 + $0x148] sm:$0xff] %v2097
          %2162 = vst [vmem:[%s278 + $0x150] sm:$0xff] %v2098
          %2163 = vst [vmem:[%s278 + $0x158] sm:$0xff] %v2099
          %2164 = vst [vmem:[%s278 + $0x160] sm:$0xff] %v2100
          %2165 = vst [vmem:[%s278 + $0x168] sm:$0xff] %v2101
          %2166 = vst [vmem:[%s278 + $0x170] sm:$0xff] %v2102
          %2167 = vst [vmem:[%s278 + $0x178] sm:$0xff] %v2103
          %2168 = vst [vmem:[%s278 + $0x180] sm:$0xff] %v2104
          %2169 = vst [vmem:[%s278 + $0x188] sm:$0xff] %v2105
          %2170 = vst [vmem:[%s278 + $0x190] sm:$0xff] %v2106
          %2171 = vst [vmem:[%s278 + $0x198] sm:$0xff] %v2107
          %2172 = vst [vmem:[%s278 + $0x1a0] sm:$0xff] %v2108
          %2173 = vst [vmem:[%s278 + $0x1a8] sm:$0xff] %v2109
          %2174 = vst [vmem:[%s278 + $0x1b0] sm:$0xff] %v2110
          %2175 = vst [vmem:[%s278 + $0x1b8] sm:$0xff] %v2111
          %2176 = vst [vmem:[%s278 + $0x1c0] sm:$0xff] %v2112
          %2177 = vst [vmem:[%s278 + $0x1c8] sm:$0xff] %v2113
          %2178 = vst [vmem:[%s278 + $0x1d0] sm:$0xff] %v2114
          %2179 = vst [vmem:[%s278 + $0x1d8] sm:$0xff] %v2115
          %2180 = vst [vmem:[%s278 + $0x1e0] sm:$0xff] %v2116
          %2181 = vst [vmem:[%s278 + $0x1e8] sm:$0xff] %v2117
          %2182 = vst [vmem:[%s278 + $0x1f0] sm:$0xff] %v2118
          %2183 = vst [vmem:[%s278 + $0x1f8] sm:$0xff] %v2119
        $region52: #{tpu_custom_call.1} parent=31 // pred_fallthru
          _
        %s2184 = sand.u32 %s121, 1
        %s2185 = scalar_lea.sflag [#allocation7], %s2184
        %s2186 = sand.u32 %s121, 1
        %s2187 = smul.addr %s2186, 512
        %s2188 = scalar_lea.vmem [#allocation11], %s2187
        // Predicated region
        $region53: #{tpu_custom_call.1} parent=31 // pred_check
          %p2189 = pneg %p131
        $region54: #{tpu_custom_call.1} parent=31 // pred_check_branch
          %2191 = sbr.rel (%p2189) target = $region56
        $region55: #{tpu_custom_call.1} parent=31 // pred_region
          %s2192 = smul.u32 16, %s27
          %s2194 = ssub.s32 8192, 8192
          %2195 = vsyncadd %s2185, %s2194
          %s2196 = smul.addr %s2192, 4
          %s2197 = smul.addr %s2196, 128
          %s2198 = scalar_lea.hbm %s3, %s2197
          %s2199 = sshll.u32 %s2188, 4
          %s2200 = int_to_ptr.vmem [resolvable:$true] %s2199
          %2205 = dma.vmem_to_hbm [thread:$0]  %s2200, 8192, %s2198, %s2185, 512, 512, 32
        $region56: #{tpu_custom_call.1} parent=31 // pred_fallthru
          _
      $region32: #{tpu_custom_call.1} parent=5 // pred_fallthru
        _
      %p2206 = scmp.le.s32.totalorder 2, %s18
      // Predicated region
      $region57: #{tpu_custom_call.1} parent=5 // pred_check
        %p2207 = pneg %p2206
      $region58: #{tpu_custom_call.1} parent=5 // pred_check_branch
        %2209 = sbr.rel (%p2207) target = $region60
      $region59: #{tpu_custom_call.1} parent=5 // pred_region
        %s2210 = ssub.s32 %s18, 2
        // Predicated region
        $region61: #{tpu_custom_call.1} parent=59 // pred_check
          %p2211 = pneg %p137
        $region62: #{tpu_custom_call.1} parent=59 // pred_check_branch
          %2213 = sbr.rel (%p2211) target = $region64
        $region63: #{tpu_custom_call.1} parent=59 // pred_region
          %s2214 = sand.u32 %s122, 1
          %s2215 = scalar_lea.sflag [#allocation7], %s2214
          %s2216 = sand.u32 %s122, 1
          %s2217 = smul.addr %s2216, 512
          %s2218 = scalar_lea.vmem [#allocation11], %s2217
          %2219 = dma.done %s2215, 8192
        $region64: #{tpu_custom_call.1} parent=59 // pred_fallthru
          _
      $region60: #{tpu_custom_call.1} parent=5 // pred_fallthru
        _
    $region6: #{tpu_custom_call.1} parent=1 // loop_footer
      %s22 = sadd.s32 1, %s18
    $region7: #{tpu_custom_call.1} parent=1 // loop_footer_branch
      %17 = sbr.rel target = $region3
    $region8: #{tpu_custom_call.1} parent=1 // loop_exit
      _
    %2220 = vsyncpa [#allocation6], 1
    %s2221 = scalar_lea.sflag [#allocation6], 1
    %2222 = vsyncpa %s2221, 1
    %2223 = vsyncpa [#allocation9], 1
    %s2224 = scalar_lea.sflag [#allocation9], 1
    %2225 = vsyncpa %s2224, 1
    %2226 = vsyncpa [#allocation7], 1
    %s2227 = scalar_lea.sflag [#allocation7], 1
    %2228 = vsyncpa %s2227, 1

</llo_original>
